<compile_context>
chip_gen: v7x
topology: tpu7x:2x2x1
jax: 0.10.0
libtpu: 0.0.40
codegen_flags: <defaults>
</compile_context>

<pallas_src>
import math
import functools

import jax
import jax.numpy as jnp
from jax import lax
from jax.experimental import pallas as pl
from jax.experimental.pallas import tpu as pltpu


# --------------------------------------------------------------------------
# VMEM budgeting helper: generation-aware, only override when actually needed.
# --------------------------------------------------------------------------
def _maybe_vmem_limit(need_bytes):
    """Return a vmem_limit_bytes override or None.

    The conservative 16 MiB default scoped limit is used as the "no override"
    threshold on all generations; the hard cap is ~75% of the chip's physical
    VMEM (v7x: ~48 MiB of 64; v5e/v6e: ~96 MiB of 128) so Mosaic scratch and the
    pipeline's double buffers always have headroom.
    """
    default_scoped = 16 * 1024 * 1024
    try:
        cap = getattr(pltpu.get_tpu_info(), "vmem_capacity_bytes",
                      64 * 1024 * 1024)
    except Exception:
        cap = 64 * 1024 * 1024
    hard_cap = max(32 * 1024 * 1024, int(cap * 0.75))
    if need_bytes <= default_scoped:
        return None
    return int(min(need_bytes, hard_cap))


# --------------------------------------------------------------------------
# Pallas kernel: one fused nn.TransformerEncoderLayer (post-norm, ReLU FFN, eval)
# grid = (batch,), one [LP, C] sequence per step, heads batched on the MXU.
# valid_len arrives as an SMEM scalar (scalar prefetch) -> no recompiles per S.
# --------------------------------------------------------------------------
def _encoder_layer_kernel(valid_len_ref, x_ref, wqkv_ref, bqkv_ref, wo_ref, bo_ref,
                          ln1g_ref, ln1b_ref, w1_ref, b1_ref, w2_ref, b2_ref,
                          ln2g_ref, ln2b_ref, o_ref, *, num_heads):
    f32, bf16 = jnp.float32, jnp.bfloat16

    x_bf = x_ref[...].astype(bf16)                  # [L, C] bf16 (inter-layer dtype)
    x = x_bf.astype(f32)                            # f32 residual stream
    L, C = x.shape
    H = num_heads
    Dh = C // H

    # ---- fused QKV projection (weights pre-transposed [C, 3C], bf16; the
    #      1/sqrt(Dh) scale is already folded into the Q columns/bias) ---------
    qkv = jnp.dot(x_bf, wqkv_ref[...],
                  preferred_element_type=f32) + bqkv_ref[...].astype(f32)  # [L, 3C]

    def split_heads(x2d):
        # [L, C] -> [H, L, Dh]: head-major so every attention stage is one big
        # batched MXU op (no per-head Python loop).
        return pltpu.einshape("lhd->hld", x2d.reshape(L, H, Dh))

    q = split_heads(qkv[:, 0 * C:1 * C]).astype(bf16)
    k = split_heads(qkv[:, 1 * C:2 * C]).astype(bf16)
    v = split_heads(qkv[:, 2 * C:3 * C]).astype(bf16)

    # ---- batched multi-head self-attention ----------------------------------
    s = jnp.einsum("hld,hmd->hlm", q, k, preferred_element_type=f32)    # [H, L, L]
    # Mask padded key columns (sequence zero-padded to a multiple of 8 rows).
    valid_len = valid_len_ref[0]
    key_ok = lax.broadcasted_iota(jnp.int32, (1, 1, L), 2) < valid_len
    s = jnp.where(key_ok, s, -1e30)
    s = s - jnp.max(s, axis=-1, keepdims=True)
    p = jnp.exp(s)
    p = p * pl.reciprocal(jnp.sum(p, axis=-1, keepdims=True), approx=True)
    ctx = jnp.einsum("hlm,hmd->hld", p.astype(bf16), v,
                     preferred_element_type=f32)                         # [H, L, Dh]

    # head merge fused into the output projection (wo stored as [H, Dh, C]):
    # batched per-head matmul then accumulate over H -- no transpose/relayout.
    attn = jnp.einsum("hld,hdc->hlc", ctx.astype(bf16), wo_ref[...],
                      preferred_element_type=f32).sum(axis=0)            # [L, C]
    attn = attn + bo_ref[...].astype(f32)

    def layer_norm(y, g_ref, b_ref):
        # centered two-pass variance (safer than E[x^2]-E[x]^2 for post-norm
        # residual streams); the extra lane reduction is cheap vs. the matmuls.
        mu = jnp.mean(y, axis=-1, keepdims=True)
        d = y - mu
        var = jnp.mean(d * d, axis=-1, keepdims=True)
        return (d * lax.rsqrt(var + 1e-5)
                * g_ref[...].astype(f32) + b_ref[...].astype(f32))

    x1 = layer_norm(x + attn, ln1g_ref, ln1b_ref)

    # ---- feed-forward --------------------------------------------------------
    h1 = jnp.dot(x1.astype(bf16), w1_ref[...],
                 preferred_element_type=f32) + b1_ref[...].astype(f32)
    h1 = jnp.maximum(h1, 0.0)
    ff = jnp.dot(h1.astype(bf16), w2_ref[...],
                 preferred_element_type=f32) + b2_ref[...].astype(f32)

    x2 = layer_norm(x1 + ff, ln2g_ref, ln2b_ref)
    o_ref[...] = x2.astype(o_ref.dtype)


def encoder_layer(x, valid_len_arr, lp, *, num_heads):
    """x: [B, LP, C] bf16 ; valid_len_arr: [1] int32 ; lp: per-layer params."""
    B, LP, C = x.shape
    H = num_heads
    assert C % H == 0
    Dh = C // H
    FF = lp["w1_t"].shape[1]
    r2 = lambda v: v.reshape(1, -1)

    def fullspec(shape):
        n = len(shape)
        return pl.BlockSpec(shape, lambda b, vl, _n=n: (0,) * _n)

    seq_spec = pl.BlockSpec((None, LP, C), lambda b, vl: (b, 0, 0))  # batch squeezed

    # VMEM budget: weights + (double-buffered) bf16 seq I/O + a rough estimate of
    # the in-kernel intermediates.  Only overrides the default when needed.
    nbytes = lambda a: a.size * a.dtype.itemsize
    weight_bytes = sum(nbytes(lp[k]) for k in ("wqkv_t", "wo_hdc", "w1_t", "w2_t"))
    io_bytes = 2 * LP * C * x.dtype.itemsize
    act_bytes = 4 * (LP * 3 * C + 2 * H * LP * LP + 2 * H * LP * Dh
                     + H * LP * C + LP * FF + 4 * LP * C)
    vmem_limit = _maybe_vmem_limit(2 * (weight_bytes + io_bytes) + act_bytes)

    grid_spec = pltpu.PrefetchScalarGridSpec(
        num_scalar_prefetch=1,
        grid=(B,),
        in_specs=[
            seq_spec,
            fullspec((C, 3 * C)), fullspec((1, 3 * C)),
            fullspec((H, Dh, C)), fullspec((1, C)),
            fullspec((1, C)),     fullspec((1, C)),
            fullspec((C, FF)),    fullspec((1, FF)),
            fullspec((FF, C)),    fullspec((1, C)),
            fullspec((1, C)),     fullspec((1, C)),
        ],
        out_specs=pl.BlockSpec((None, LP, C), lambda b, vl: (b, 0, 0)),
    )

    return pl.pallas_call(
        functools.partial(_encoder_layer_kernel, num_heads=num_heads),
        out_shape=jax.ShapeDtypeStruct((B, LP, C), x.dtype),
        grid_spec=grid_spec,
        compiler_params=pltpu.CompilerParams(
            dimension_semantics=("parallel",),       # batch across TensorCores
            vmem_limit_bytes=vmem_limit),
    )(valid_len_arr, x, lp["wqkv_t"], r2(lp["bqkv"]), lp["wo_hdc"], r2(lp["bo"]),
      r2(lp["ln1g"]), r2(lp["ln1b"]), lp["w1_t"], r2(lp["b1"]),
      lp["w2_t"], r2(lp["b2"]), r2(lp["ln2g"]), r2(lp["ln2b"]))


# --------------------------------------------------------------------------
# Model glue (positional encoding table, parameter init, full forward)
# --------------------------------------------------------------------------
def make_pe(max_len, d_model):
    position = jnp.arange(max_len, dtype=jnp.float32)[:, None]
    div_term = jnp.exp(jnp.arange(0, d_model, 2, dtype=jnp.float32)
                       * (-math.log(10000.0) / d_model))
    pe = jnp.zeros((max_len, d_model), jnp.float32)
    pe = pe.at[:, 0::2].set(jnp.sin(position * div_term))
    pe = pe.at[:, 1::2].set(jnp.cos(position * div_term))
    return pe


def init_params(key, *, in_ch, out_ch, cond_dim, C, FF, num_layers, num_heads,
                max_len):
    """Linear weights are stored pre-transposed to [in_features, out_features];
    the large Pallas-side matrices are bf16.  The 1/sqrt(Dh) attention scale is
    folded into the Q columns of wqkv and the Q bias; wo is pre-reshaped to
    [H, Dh, C].  (To load PyTorch weights: take W.T, fold/reshape, cast.)"""
    assert C % num_heads == 0
    Dh = C // num_heads
    attn_scale = 1.0 / math.sqrt(Dh)

    def nrm(k, shape, scale=0.05, dtype=jnp.float32):
        return (scale * jax.random.normal(k, shape, jnp.float32)).astype(dtype)

    keys = jax.random.split(key, 5 + num_layers)
    p = {
        # tiny projections (plain-JAX path), kept f32:
        "w_in_t": nrm(keys[0], (in_ch, C)),      "b_in": jnp.zeros((C,), jnp.float32),
        "w_cond_t": nrm(keys[1], (cond_dim, C)), "b_cond": jnp.zeros((C,), jnp.float32),
        "w_t1_t": nrm(keys[2], (C, C)),          "b_t1": jnp.zeros((C,), jnp.float32),
        "w_t2_t": nrm(keys[3], (C, C)),          "b_t2": jnp.zeros((C,), jnp.float32),
        "w_out_t": nrm(keys[4], (C, out_ch)),    "b_out": jnp.zeros((out_ch,), jnp.float32),
        "pe": make_pe(max_len, C),
    }
    # fold the attention scale into the Q output columns / bias
    q_col_scale = jnp.concatenate(
        [jnp.full((C,), attn_scale, jnp.float32), jnp.ones((2 * C,), jnp.float32)])

    layers = []
    for l in range(num_layers):
        lk = jax.random.split(keys[5 + l], 4)
        wqkv = (0.05 * jax.random.normal(lk[0], (C, 3 * C), jnp.float32)
                * q_col_scale[None, :])
        bqkv = jnp.zeros((3 * C,), jnp.float32) * q_col_scale
        wo = 0.05 * jax.random.normal(lk[1], (C, C), jnp.float32)
        layers.append(dict(
            wqkv_t=wqkv.astype(jnp.bfloat16),
            bqkv=bqkv,
            # out-proj weight pre-reshaped to [H, Dh, C]: head-merge fused into
            # the projection inside the kernel (no in-kernel transpose/relayout)
            wo_hdc=wo.reshape(num_heads, Dh, C).astype(jnp.bfloat16),
            bo=jnp.zeros((C,), jnp.float32),
            ln1g=jnp.ones((C,), jnp.float32), ln1b=jnp.zeros((C,), jnp.float32),
            w1_t=nrm(lk[2], (C, FF), dtype=jnp.bfloat16),
            b1=jnp.zeros((FF,), jnp.float32),
            w2_t=nrm(lk[3], (FF, C), dtype=jnp.bfloat16),
            b2=jnp.zeros((C,), jnp.float32),
            ln2g=jnp.ones((C,), jnp.float32), ln2b=jnp.zeros((C,), jnp.float32),
        ))
    p["layers"] = layers
    return p


def mdm_forward(params, x, timesteps, *, in_channels, num_heads, seq_align=8):
    """x: [B, S, in_channels + condition_dim], timesteps: [B] int32."""
    B, S, _ = x.shape
    pe = params["pe"]                                            # [max_len, C]

    # --- tiny projections in plain JAX (XLA fuses these few-KB matmuls; a
    #     pallas_call each would be pure launch overhead) ----------------------
    cond_emb = x[:, 0, in_channels:]                             # [B, cond_dim]
    cond_proj = cond_emb @ params["w_cond_t"] + params["b_cond"] # [B, C]

    t_pe = pe[timesteps]                                         # [B, C]
    h = jax.nn.silu(t_pe @ params["w_t1_t"] + params["b_t1"])
    t_emb = h @ params["w_t2_t"] + params["b_t2"]                # [B, C]

    emb = (cond_proj + t_emb)[:, None, :]                        # [B, 1, C]

    # --- input projection (K = in_channels = 3) stays in plain JAX; it fuses
    #     with the concat + positional-encoding add (no extra HBM round-trip) --
    x_in = x[:, :, :in_channels] @ params["w_in_t"] + params["b_in"]        # [B,S,C]

    # prepend embedding token, add positional encoding (dropout == identity, eval)
    L = S + 1
    xseq = jnp.concatenate([emb, x_in], axis=1) + pe[:L][None, :, :]        # [B,L,C]

    # pad rows only to the sublane granularity; padded keys are masked in-kernel.
    LP = ((L + seq_align - 1) // seq_align) * seq_align
    if LP != L:
        xseq = jnp.pad(xseq, ((0, 0), (0, LP - L), (0, 0)))

    # inter-layer activations in bf16 (halves per-layer HBM traffic); all
    # in-kernel math is f32.
    xseq = xseq.astype(jnp.bfloat16)
    valid_len_arr = jnp.full((1,), L, jnp.int32)

    # transformer encoder stack (fused Pallas layer kernel)
    for lp_params in params["layers"]:
        xseq = encoder_layer(xseq, valid_len_arr, lp_params, num_heads=num_heads)

    # drop the embedding token + padding; out_channels is tiny (3) so the output
    # projection stays in plain JAX (a Pallas store would be fully lane-masked).
    out = (xseq[:, 1:L, :].astype(jnp.float32) @ params["w_out_t"]
           + params["b_out"])                                    # [B, S, out_ch]
    return out


# --------------------------------------------------------------------------
if __name__ == "__main__":
    # small, MDM-consistent shapes: d_model divisible by num_heads
    B, S = 2, 8
    in_ch, out_ch, cond_dim = 3, 3, 2
    C, H, FF, NUM_LAYERS = 32, 4, 64, 2
    MAX_LEN = 64

    root = jax.random.PRNGKey(0)
    k_param, k_x, k_t = jax.random.split(root, 3)

    params = init_params(k_param, in_ch=in_ch, out_ch=out_ch, cond_dim=cond_dim,
                         C=C, FF=FF, num_layers=NUM_LAYERS, num_heads=H,
                         max_len=MAX_LEN)

    x = jax.random.normal(k_x, (B, S, in_ch + cond_dim), jnp.float32)
    timesteps = jax.random.randint(k_t, (B,), 0, MAX_LEN, dtype=jnp.int32)

    fwd = jax.jit(functools.partial(mdm_forward, in_channels=in_ch, num_heads=H))
    out = jax.block_until_ready(fwd(params, x, timesteps))

    assert out.shape == (B, S, out_ch), out.shape
    assert bool(jnp.all(jnp.isfinite(out)))
    print("KERNEL_OK")
</pallas_src>

<mosaic_0001>
module attributes {stable_mosaic.version = 11 : i64} {
  func.func @_encoder_layer_kernel(%arg0: i32, %arg1: memref<1xi32, #tpu.memory_space<smem>>, %arg2: memref<1x16x32xbf16, #tpu.memory_space<vmem>>, %arg3: memref<32x96xbf16, #tpu.memory_space<vmem>>, %arg4: memref<1x96xf32, #tpu.memory_space<vmem>>, %arg5: memref<4x8x32xbf16, #tpu.memory_space<vmem>>, %arg6: memref<1x32xf32, #tpu.memory_space<vmem>>, %arg7: memref<1x32xf32, #tpu.memory_space<vmem>>, %arg8: memref<1x32xf32, #tpu.memory_space<vmem>>, %arg9: memref<32x64xbf16, #tpu.memory_space<vmem>>, %arg10: memref<1x64xf32, #tpu.memory_space<vmem>>, %arg11: memref<64x32xbf16, #tpu.memory_space<vmem>>, %arg12: memref<1x32xf32, #tpu.memory_space<vmem>>, %arg13: memref<1x32xf32, #tpu.memory_space<vmem>>, %arg14: memref<1x32xf32, #tpu.memory_space<vmem>>, %arg15: memref<1x16x32xbf16, #tpu.memory_space<vmem>>) attributes {dimension_semantics = [#tpu.dimension_semantics<parallel>], iteration_bounds = array<i64: 2>, scalar_prefetch = 1 : i64, scratch_operands = 0 : i64, tpu.core_type = #tpu.core_type<tc>, window_params = [{transform_indices = @transform_0, window_bounds = array<i64: 1, 16, 32>}, {pipeline_mode = #tpu.pipeline_mode<synchronous>, transform_indices = @transform_1, window_bounds = array<i64: 32, 96>}, {pipeline_mode = #tpu.pipeline_mode<synchronous>, transform_indices = @transform_2, window_bounds = array<i64: 1, 96>}, {pipeline_mode = #tpu.pipeline_mode<synchronous>, transform_indices = @transform_3, window_bounds = array<i64: 4, 8, 32>}, {pipeline_mode = #tpu.pipeline_mode<synchronous>, transform_indices = @transform_4, window_bounds = array<i64: 1, 32>}, {pipeline_mode = #tpu.pipeline_mode<synchronous>, transform_indices = @transform_5, window_bounds = array<i64: 1, 32>}, {pipeline_mode = #tpu.pipeline_mode<synchronous>, transform_indices = @transform_6, window_bounds = array<i64: 1, 32>}, {pipeline_mode = #tpu.pipeline_mode<synchronous>, transform_indices = @transform_7, window_bounds = array<i64: 32, 64>}, {pipeline_mode = #tpu.pipeline_mode<synchronous>, transform_indices = @transform_8, window_bounds = array<i64: 1, 64>}, {pipeline_mode = #tpu.pipeline_mode<synchronous>, transform_indices = @transform_9, window_bounds = array<i64: 64, 32>}, {pipeline_mode = #tpu.pipeline_mode<synchronous>, transform_indices = @transform_10, window_bounds = array<i64: 1, 32>}, {pipeline_mode = #tpu.pipeline_mode<synchronous>, transform_indices = @transform_11, window_bounds = array<i64: 1, 32>}, {pipeline_mode = #tpu.pipeline_mode<synchronous>, transform_indices = @transform_12, window_bounds = array<i64: 1, 32>}, {transform_indices = @transform_13, window_bounds = array<i64: 1, 16, 32>}]} {
    %c0 = arith.constant 0 : index
    %c0_0 = arith.constant 0 : index
    %c0_1 = arith.constant 0 : index
    %0 = vector.load %arg2[%c0, %c0_0, %c0_1] : memref<1x16x32xbf16, #tpu.memory_space<vmem>>, vector<1x16x32xbf16>
    %1 = vector.shape_cast %0 : vector<1x16x32xbf16> to vector<16x32xbf16>
    %2 = arith.extf %1 : vector<16x32xbf16> to vector<16x32xf32>
    %c0_2 = arith.constant 0 : index
    %c0_3 = arith.constant 0 : index
    %3 = vector.load %arg3[%c0_2, %c0_3] : memref<32x96xbf16, #tpu.memory_space<vmem>>, vector<32x96xbf16>
    %cst = arith.constant dense<0.000000e+00> : vector<16x96xf32>
    %4 = tpu.matmul %1, %3, %cst {dimension_numbers = #tpu.dot_dimension_numbers<[1], [0], [0], [1], [0, 0, 1, 1], [], []>} : vector<16x32xbf16>, vector<32x96xbf16>, vector<16x96xf32> -> vector<16x96xf32>
    %c0_4 = arith.constant 0 : index
    %c0_5 = arith.constant 0 : index
    %5 = vector.load %arg4[%c0_4, %c0_5] : memref<1x96xf32, #tpu.memory_space<vmem>>, vector<1x96xf32>
    %6 = vector.broadcast %5 : vector<1x96xf32> to vector<16x96xf32>
    %7 = arith.addf %4, %6 : vector<16x96xf32>
    %8 = vector.extract_strided_slice %7 {offsets = [0, 0], sizes = [16, 32], strides = [1, 1]} : vector<16x96xf32> to vector<16x32xf32>
    %9 = vector.shape_cast %8 : vector<16x32xf32> to vector<16x4x8xf32>
    %10 = tpu.transpose %9, [1, 0, 2] : vector<16x4x8xf32> -> vector<4x16x8xf32>
    %11 = arith.truncf %10 : vector<4x16x8xf32> to vector<4x16x8xbf16>
    %12 = vector.extract_strided_slice %7 {offsets = [0, 32], sizes = [16, 32], strides = [1, 1]} : vector<16x96xf32> to vector<16x32xf32>
    %13 = vector.shape_cast %12 : vector<16x32xf32> to vector<16x4x8xf32>
    %14 = tpu.transpose %13, [1, 0, 2] : vector<16x4x8xf32> -> vector<4x16x8xf32>
    %15 = arith.truncf %14 : vector<4x16x8xf32> to vector<4x16x8xbf16>
    %16 = vector.extract_strided_slice %7 {offsets = [0, 64], sizes = [16, 32], strides = [1, 1]} : vector<16x96xf32> to vector<16x32xf32>
    %17 = vector.shape_cast %16 : vector<16x32xf32> to vector<16x4x8xf32>
    %18 = tpu.transpose %17, [1, 0, 2] : vector<16x4x8xf32> -> vector<4x16x8xf32>
    %19 = arith.truncf %18 : vector<4x16x8xf32> to vector<4x16x8xbf16>
    "tpu.trace_start"() <{level = 10 : i32, message = "hld,hmd->hlm"}> : () -> ()
    %cst_6 = arith.constant dense<0.000000e+00> : vector<4x16x16xf32>
    %20 = tpu.matmul %11, %15, %cst_6 {dimension_numbers = #tpu.dot_dimension_numbers<[2], [2], [1], [1], [0, 0, 0, 1, 1, 1], [0], [0]>} : vector<4x16x8xbf16>, vector<4x16x8xbf16>, vector<4x16x16xf32> -> vector<4x16x16xf32>
    "tpu.trace_stop"() : () -> ()
    %c0_7 = arith.constant 0 : index
    %21 = memref.load %arg1[%c0_7] : memref<1xi32, #tpu.memory_space<smem>>
    %22 = tpu.iota {dimensions = array<i32: 2>} : vector<1x1x16xi32>
    %23 = vector.broadcast %21 : i32 to vector<1x1x16xi32>
    %24 = arith.cmpi slt, %22, %23 : vector<1x1x16xi32>
    %cst_8 = arith.constant -1.000000e+30 : f32
    %25 = vector.shape_cast %24 : vector<1x1x16xi1> to vector<1x1x16xi1>
    %26 = vector.broadcast %25 : vector<1x1x16xi1> to vector<4x16x16xi1>
    %27 = vector.broadcast %cst_8 : f32 to vector<4x16x16xf32>
    %28 = arith.select %26, %20, %27 : vector<4x16x16xi1>, vector<4x16x16xf32>
    %cst_9 = arith.constant dense<0xFF800000> : vector<4x16xf32>
    %29 = vector.multi_reduction <maximumf>, %28, %cst_9 [2] : vector<4x16x16xf32> to vector<4x16xf32>
    %30 = vector.shape_cast %29 : vector<4x16xf32> to vector<4x16x1xf32>
    %31 = vector.broadcast %30 : vector<4x16x1xf32> to vector<4x16x16xf32>
    %32 = arith.subf %28, %31 : vector<4x16x16xf32>
    %33 = math.exp %32 : vector<4x16x16xf32>
    %cst_10 = arith.constant dense<0.000000e+00> : vector<4x16xf32>
    %34 = vector.multi_reduction <add>, %33, %cst_10 [2] : vector<4x16x16xf32> to vector<4x16xf32>
    %35 = vector.shape_cast %34 : vector<4x16xf32> to vector<4x16x1xf32>
    %36 = tpu.reciprocal %35 {approx = true} : vector<4x16x1xf32> -> vector<4x16x1xf32>
    %37 = vector.broadcast %36 : vector<4x16x1xf32> to vector<4x16x16xf32>
    %38 = arith.mulf %33, %37 : vector<4x16x16xf32>
    %39 = arith.truncf %38 : vector<4x16x16xf32> to vector<4x16x16xbf16>
    "tpu.trace_start"() <{level = 10 : i32, message = "hlm,hmd->hld"}> : () -> ()
    %cst_11 = arith.constant dense<0.000000e+00> : vector<4x16x8xf32>
    %40 = tpu.matmul %39, %19, %cst_11 {dimension_numbers = #tpu.dot_dimension_numbers<[2], [1], [1], [2], [0, 0, 0, 1, 1, 2], [0], [0]>} : vector<4x16x16xbf16>, vector<4x16x8xbf16>, vector<4x16x8xf32> -> vector<4x16x8xf32>
    "tpu.trace_stop"() : () -> ()
    %41 = arith.truncf %40 : vector<4x16x8xf32> to vector<4x16x8xbf16>
    %c0_12 = arith.constant 0 : index
    %c0_13 = arith.constant 0 : index
    %c0_14 = arith.constant 0 : index
    %42 = vector.load %arg5[%c0_12, %c0_13, %c0_14] : memref<4x8x32xbf16, #tpu.memory_space<vmem>>, vector<4x8x32xbf16>
    "tpu.trace_start"() <{level = 10 : i32, message = "hld,hdc->hlc"}> : () -> ()
    %cst_15 = arith.constant dense<0.000000e+00> : vector<4x16x32xf32>
    %43 = tpu.matmul %41, %42, %cst_15 {dimension_numbers = #tpu.dot_dimension_numbers<[2], [1], [1], [2], [0, 0, 0, 1, 1, 2], [0], [0]>} : vector<4x16x8xbf16>, vector<4x8x32xbf16>, vector<4x16x32xf32> -> vector<4x16x32xf32>
    "tpu.trace_stop"() : () -> ()
    %cst_16 = arith.constant dense<0.000000e+00> : vector<16x32xf32>
    %44 = vector.multi_reduction <add>, %43, %cst_16 [0] : vector<4x16x32xf32> to vector<16x32xf32>
    %c0_17 = arith.constant 0 : index
    %c0_18 = arith.constant 0 : index
    %45 = vector.load %arg6[%c0_17, %c0_18] : memref<1x32xf32, #tpu.memory_space<vmem>>, vector<1x32xf32>
    %46 = vector.broadcast %45 : vector<1x32xf32> to vector<16x32xf32>
    %47 = arith.addf %44, %46 : vector<16x32xf32>
    %48 = arith.addf %2, %47 : vector<16x32xf32>
    %cst_19 = arith.constant dense<0.000000e+00> : vector<16xf32>
    %49 = vector.multi_reduction <add>, %48, %cst_19 [1] : vector<16x32xf32> to vector<16xf32>
    %50 = vector.shape_cast %49 : vector<16xf32> to vector<16x1xf32>
    %cst_20 = arith.constant 3.200000e+01 : f32
    %51 = vector.broadcast %cst_20 : f32 to vector<16x1xf32>
    %52 = arith.divf %50, %51 : vector<16x1xf32>
    %53 = vector.broadcast %52 : vector<16x1xf32> to vector<16x32xf32>
    %54 = arith.subf %48, %53 : vector<16x32xf32>
    %55 = arith.mulf %54, %54 : vector<16x32xf32>
    %cst_21 = arith.constant dense<0.000000e+00> : vector<16xf32>
    %56 = vector.multi_reduction <add>, %55, %cst_21 [1] : vector<16x32xf32> to vector<16xf32>
    %57 = vector.shape_cast %56 : vector<16xf32> to vector<16x1xf32>
    %cst_22 = arith.constant 3.200000e+01 : f32
    %58 = vector.broadcast %cst_22 : f32 to vector<16x1xf32>
    %59 = arith.divf %57, %58 : vector<16x1xf32>
    %cst_23 = arith.constant 9.99999974E-6 : f32
    %60 = vector.broadcast %cst_23 : f32 to vector<16x1xf32>
    %61 = arith.addf %59, %60 : vector<16x1xf32>
    %62 = math.rsqrt %61 : vector<16x1xf32>
    %63 = vector.broadcast %62 : vector<16x1xf32> to vector<16x32xf32>
    %64 = arith.mulf %54, %63 : vector<16x32xf32>
    %c0_24 = arith.constant 0 : index
    %c0_25 = arith.constant 0 : index
    %65 = vector.load %arg7[%c0_24, %c0_25] : memref<1x32xf32, #tpu.memory_space<vmem>>, vector<1x32xf32>
    %66 = vector.broadcast %65 : vector<1x32xf32> to vector<16x32xf32>
    %67 = arith.mulf %64, %66 : vector<16x32xf32>
    %c0_26 = arith.constant 0 : index
    %c0_27 = arith.constant 0 : index
    %68 = vector.load %arg8[%c0_26, %c0_27] : memref<1x32xf32, #tpu.memory_space<vmem>>, vector<1x32xf32>
    %69 = vector.broadcast %68 : vector<1x32xf32> to vector<16x32xf32>
    %70 = arith.addf %67, %69 : vector<16x32xf32>
    %71 = arith.truncf %70 : vector<16x32xf32> to vector<16x32xbf16>
    %c0_28 = arith.constant 0 : index
    %c0_29 = arith.constant 0 : index
    %72 = vector.load %arg9[%c0_28, %c0_29] : memref<32x64xbf16, #tpu.memory_space<vmem>>, vector<32x64xbf16>
    %cst_30 = arith.constant dense<0.000000e+00> : vector<16x64xf32>
    %73 = tpu.matmul %71, %72, %cst_30 {dimension_numbers = #tpu.dot_dimension_numbers<[1], [0], [0], [1], [0, 0, 1, 1], [], []>} : vector<16x32xbf16>, vector<32x64xbf16>, vector<16x64xf32> -> vector<16x64xf32>
    %c0_31 = arith.constant 0 : index
    %c0_32 = arith.constant 0 : index
    %74 = vector.load %arg10[%c0_31, %c0_32] : memref<1x64xf32, #tpu.memory_space<vmem>>, vector<1x64xf32>
    %75 = vector.broadcast %74 : vector<1x64xf32> to vector<16x64xf32>
    %76 = arith.addf %73, %75 : vector<16x64xf32>
    %cst_33 = arith.constant 0.000000e+00 : f32
    %77 = vector.broadcast %cst_33 : f32 to vector<16x64xf32>
    %78 = arith.maximumf %76, %77 : vector<16x64xf32>
    %79 = arith.truncf %78 : vector<16x64xf32> to vector<16x64xbf16>
    %c0_34 = arith.constant 0 : index
    %c0_35 = arith.constant 0 : index
    %80 = vector.load %arg11[%c0_34, %c0_35] : memref<64x32xbf16, #tpu.memory_space<vmem>>, vector<64x32xbf16>
    %cst_36 = arith.constant dense<0.000000e+00> : vector<16x32xf32>
    %81 = tpu.matmul %79, %80, %cst_36 {dimension_numbers = #tpu.dot_dimension_numbers<[1], [0], [0], [1], [0, 0, 1, 1], [], []>} : vector<16x64xbf16>, vector<64x32xbf16>, vector<16x32xf32> -> vector<16x32xf32>
    %c0_37 = arith.constant 0 : index
    %c0_38 = arith.constant 0 : index
    %82 = vector.load %arg12[%c0_37, %c0_38] : memref<1x32xf32, #tpu.memory_space<vmem>>, vector<1x32xf32>
    %83 = vector.broadcast %82 : vector<1x32xf32> to vector<16x32xf32>
    %84 = arith.addf %81, %83 : vector<16x32xf32>
    %85 = arith.addf %70, %84 : vector<16x32xf32>
    %cst_39 = arith.constant dense<0.000000e+00> : vector<16xf32>
    %86 = vector.multi_reduction <add>, %85, %cst_39 [1] : vector<16x32xf32> to vector<16xf32>
    %87 = vector.shape_cast %86 : vector<16xf32> to vector<16x1xf32>
    %cst_40 = arith.constant 3.200000e+01 : f32
    %88 = vector.broadcast %cst_40 : f32 to vector<16x1xf32>
    %89 = arith.divf %87, %88 : vector<16x1xf32>
    %90 = vector.broadcast %89 : vector<16x1xf32> to vector<16x32xf32>
    %91 = arith.subf %85, %90 : vector<16x32xf32>
    %92 = arith.mulf %91, %91 : vector<16x32xf32>
    %cst_41 = arith.constant dense<0.000000e+00> : vector<16xf32>
    %93 = vector.multi_reduction <add>, %92, %cst_41 [1] : vector<16x32xf32> to vector<16xf32>
    %94 = vector.shape_cast %93 : vector<16xf32> to vector<16x1xf32>
    %cst_42 = arith.constant 3.200000e+01 : f32
    %95 = vector.broadcast %cst_42 : f32 to vector<16x1xf32>
    %96 = arith.divf %94, %95 : vector<16x1xf32>
    %cst_43 = arith.constant 9.99999974E-6 : f32
    %97 = vector.broadcast %cst_43 : f32 to vector<16x1xf32>
    %98 = arith.addf %96, %97 : vector<16x1xf32>
    %99 = math.rsqrt %98 : vector<16x1xf32>
    %100 = vector.broadcast %99 : vector<16x1xf32> to vector<16x32xf32>
    %101 = arith.mulf %91, %100 : vector<16x32xf32>
    %c0_44 = arith.constant 0 : index
    %c0_45 = arith.constant 0 : index
    %102 = vector.load %arg13[%c0_44, %c0_45] : memref<1x32xf32, #tpu.memory_space<vmem>>, vector<1x32xf32>
    %103 = vector.broadcast %102 : vector<1x32xf32> to vector<16x32xf32>
    %104 = arith.mulf %101, %103 : vector<16x32xf32>
    %c0_46 = arith.constant 0 : index
    %c0_47 = arith.constant 0 : index
    %105 = vector.load %arg14[%c0_46, %c0_47] : memref<1x32xf32, #tpu.memory_space<vmem>>, vector<1x32xf32>
    %106 = vector.broadcast %105 : vector<1x32xf32> to vector<16x32xf32>
    %107 = arith.addf %104, %106 : vector<16x32xf32>
    %108 = arith.truncf %107 : vector<16x32xf32> to vector<16x32xbf16>
    %c0_48 = arith.constant 0 : index
    %c0_49 = arith.constant 0 : index
    %c0_50 = arith.constant 0 : index
    %109 = vector.load %arg15[%c0_48, %c0_49, %c0_50] : memref<1x16x32xbf16, #tpu.memory_space<vmem>>, vector<1x16x32xbf16>
    %110 = vector.shape_cast %109 : vector<1x16x32xbf16> to vector<16x32xbf16>
    %111 = vector.shape_cast %108 : vector<16x32xbf16> to vector<1x16x32xbf16>
    tpu.vector_store %arg15[%c0_48, %c0_49, %c0_50], %111 {strides = array<i32>} : memref<1x16x32xbf16, #tpu.memory_space<vmem>>, vector<1x16x32xbf16>,
    return
  }
  func.func @transform_0(%arg0: i32, %arg1: memref<1xi32, #tpu.memory_space<smem>>) -> (i32, i32, i32) {
    %c0_i32 = arith.constant 0 : i32
    %c0_i32_0 = arith.constant 0 : i32
    %c0_i32_1 = arith.constant 0 : i32
    return %arg0, %c0_i32, %c0_i32_0 : i32, i32, i32
  }
  func.func @transform_1(%arg0: i32, %arg1: memref<1xi32, #tpu.memory_space<smem>>) -> (i32, i32) {
    %c0_i32 = arith.constant 0 : i32
    %c0_i32_0 = arith.constant 0 : i32
    %c0_i32_1 = arith.constant 0 : i32
    return %c0_i32, %c0_i32_0 : i32, i32
  }
  func.func @transform_2(%arg0: i32, %arg1: memref<1xi32, #tpu.memory_space<smem>>) -> (i32, i32) {
    %c0_i32 = arith.constant 0 : i32
    %c0_i32_0 = arith.constant 0 : i32
    %c0_i32_1 = arith.constant 0 : i32
    return %c0_i32, %c0_i32_0 : i32, i32
  }
  func.func @transform_3(%arg0: i32, %arg1: memref<1xi32, #tpu.memory_space<smem>>) -> (i32, i32, i32) {
    %c0_i32 = arith.constant 0 : i32
    %c0_i32_0 = arith.constant 0 : i32
    %c0_i32_1 = arith.constant 0 : i32
    %c0_i32_2 = arith.constant 0 : i32
    return %c0_i32, %c0_i32_0, %c0_i32_1 : i32, i32, i32
  }
  func.func @transform_4(%arg0: i32, %arg1: memref<1xi32, #tpu.memory_space<smem>>) -> (i32, i32) {
    %c0_i32 = arith.constant 0 : i32
    %c0_i32_0 = arith.constant 0 : i32
    %c0_i32_1 = arith.constant 0 : i32
    return %c0_i32, %c0_i32_0 : i32, i32
  }
  func.func @transform_5(%arg0: i32, %arg1: memref<1xi32, #tpu.memory_space<smem>>) -> (i32, i32) {
    %c0_i32 = arith.constant 0 : i32
    %c0_i32_0 = arith.constant 0 : i32
    %c0_i32_1 = arith.constant 0 : i32
    return %c0_i32, %c0_i32_0 : i32, i32
  }
  func.func @transform_6(%arg0: i32, %arg1: memref<1xi32, #tpu.memory_space<smem>>) -> (i32, i32) {
    %c0_i32 = arith.constant 0 : i32
    %c0_i32_0 = arith.constant 0 : i32
    %c0_i32_1 = arith.constant 0 : i32
    return %c0_i32, %c0_i32_0 : i32, i32
  }
  func.func @transform_7(%arg0: i32, %arg1: memref<1xi32, #tpu.memory_space<smem>>) -> (i32, i32) {
    %c0_i32 = arith.constant 0 : i32
    %c0_i32_0 = arith.constant 0 : i32
    %c0_i32_1 = arith.constant 0 : i32
    return %c0_i32, %c0_i32_0 : i32, i32
  }
  func.func @transform_8(%arg0: i32, %arg1: memref<1xi32, #tpu.memory_space<smem>>) -> (i32, i32) {
    %c0_i32 = arith.constant 0 : i32
    %c0_i32_0 = arith.constant 0 : i32
    %c0_i32_1 = arith.constant 0 : i32
    return %c0_i32, %c0_i32_0 : i32, i32
  }
  func.func @transform_9(%arg0: i32, %arg1: memref<1xi32, #tpu.memory_space<smem>>) -> (i32, i32) {
    %c0_i32 = arith.constant 0 : i32
    %c0_i32_0 = arith.constant 0 : i32
    %c0_i32_1 = arith.constant 0 : i32
    return %c0_i32, %c0_i32_0 : i32, i32
  }
  func.func @transform_10(%arg0: i32, %arg1: memref<1xi32, #tpu.memory_space<smem>>) -> (i32, i32) {
    %c0_i32 = arith.constant 0 : i32
    %c0_i32_0 = arith.constant 0 : i32
    %c0_i32_1 = arith.constant 0 : i32
    return %c0_i32, %c0_i32_0 : i32, i32
  }
  func.func @transform_11(%arg0: i32, %arg1: memref<1xi32, #tpu.memory_space<smem>>) -> (i32, i32) {
    %c0_i32 = arith.constant 0 : i32
    %c0_i32_0 = arith.constant 0 : i32
    %c0_i32_1 = arith.constant 0 : i32
    return %c0_i32, %c0_i32_0 : i32, i32
  }
  func.func @transform_12(%arg0: i32, %arg1: memref<1xi32, #tpu.memory_space<smem>>) -> (i32, i32) {
    %c0_i32 = arith.constant 0 : i32
    %c0_i32_0 = arith.constant 0 : i32
    %c0_i32_1 = arith.constant 0 : i32
    return %c0_i32, %c0_i32_0 : i32, i32
  }
  func.func @transform_13(%arg0: i32, %arg1: memref<1xi32, #tpu.memory_space<smem>>) -> (i32, i32, i32) {
    %c0_i32 = arith.constant 0 : i32
    %c0_i32_0 = arith.constant 0 : i32
    %c0_i32_1 = arith.constant 0 : i32
    return %arg0, %c0_i32, %c0_i32_0 : i32, i32, i32
  }
}

</mosaic_0001>

<llo_original>
// kernel: mdm_forward.2
$region0: #{mdm_forward.2}
  #allocation0 [shape = 'u32[]', space=smem, size = 0x4, offset = 0x4, fixed_abs, tag = 'smem constant byte address 0x4 - core index']
  #allocation1 [shape = 'u32[144,128]{1,0:T(1,128)}', space=vmem, size = 0x12000, scoped, tag = 'internal scratch']
  #allocation2 [shape = 's32[1]{0}', space=sflag, size = 0x4, scoped, tag = 'scoped memory for mdm_forward.2']
  #allocation3 [shape = 's32[1]{0:T(128)S(6)}', space=smem, size = 0x200, scoped, tag = 'prefetched SMEM operand 0']
  %s0 = inlined_call_operand.<no memory space> [shape: s32[1], index: 0, kind: input, shape index: {}]
  %s1 = inlined_call_operand.vmem [shape: bf16[2,16,32], index: 1, kind: input, shape index: {}]
  %s2 = inlined_call_operand.vmem [shape: bf16[32,96], index: 2, kind: input, shape index: {}]
  %s3 = inlined_call_operand.vmem [shape: f32[1,96], index: 3, kind: input, shape index: {}]
  %s4 = inlined_call_operand.vmem [shape: bf16[4,8,32], index: 4, kind: input, shape index: {}]
  %s5 = inlined_call_operand.vmem [shape: f32[1,32], index: 5, kind: input, shape index: {}]
  %s6 = inlined_call_operand.vmem [shape: f32[1,32], index: 6, kind: input, shape index: {}]
  %s7 = inlined_call_operand.vmem [shape: f32[1,32], index: 7, kind: input, shape index: {}]
  %s8 = inlined_call_operand.vmem [shape: bf16[32,64], index: 8, kind: input, shape index: {}]
  %s9 = inlined_call_operand.vmem [shape: f32[1,64], index: 9, kind: input, shape index: {}]
  %s10 = inlined_call_operand.vmem [shape: bf16[64,32], index: 10, kind: input, shape index: {}]
  %s11 = inlined_call_operand.vmem [shape: f32[1,32], index: 11, kind: input, shape index: {}]
  %s12 = inlined_call_operand.vmem [shape: f32[1,32], index: 12, kind: input, shape index: {}]
  %s13 = inlined_call_operand.vmem [shape: f32[1,32], index: 13, kind: input, shape index: {}]
  %s14 = inlined_call_operand.vmem [shape: bf16[2,16,32], index: 14, kind: output, shape index: {}]
  %s15 = sld [smem:[#allocation0]]
  $region85: #{mdm_forward.2} parent=0
    _
  %s17 = ssub.s32 1, %s15
  %s18 = scalar_select 0, %s17, %s15
  %19 = sst [smem:[#allocation3]] %s0
  loop: start=0, step=1, limit=4
  $region2: #{mdm_forward.2} parent=0 // loop_pre_header
    _
  $region3: #{mdm_forward.2} parent=0 // loop_header
    %s21 = sphi 0, %s25
    %p22 = scmp.ge.s32.totalorder %s21, 4
    %s31 = sphi 0, %s33
    %s34 = sphi 0, %s31
    %s35 = sphi 0, %s34
    %s51 = sphi 0, %s35
    %s55 = sphi 0, %s55
    %s57 = sphi 0, %s55
    %s58 = sphi 0, %s57
    %s72 = sphi 0, %s58
    %s76 = sphi 0, %s76
    %s78 = sphi 0, %s76
    %s79 = sphi 0, %s78
    %s93 = sphi 0, %s79
    %s97 = sphi 0, %s97
    %s99 = sphi 0, %s97
    %s100 = sphi 0, %s99
    %s114 = sphi 0, %s100
    %s118 = sphi 0, %s118
    %s120 = sphi 0, %s118
    %s121 = sphi 0, %s120
    %s135 = sphi 0, %s121
    %s139 = sphi 0, %s139
    %s141 = sphi 0, %s139
    %s142 = sphi 0, %s141
    %s156 = sphi 0, %s142
    %s160 = sphi 0, %s160
    %s162 = sphi 0, %s160
    %s163 = sphi 0, %s162
    %s177 = sphi 0, %s163
    %s181 = sphi 0, %s181
    %s183 = sphi 0, %s181
    %s184 = sphi 0, %s183
    %s198 = sphi 0, %s184
    %s202 = sphi 0, %s202
    %s204 = sphi 0, %s202
    %s205 = sphi 0, %s204
    %s219 = sphi 0, %s205
    %s223 = sphi 0, %s223
    %s225 = sphi 0, %s223
    %s226 = sphi 0, %s225
    %s240 = sphi 0, %s226
    %s244 = sphi 0, %s244
    %s246 = sphi 0, %s244
    %s247 = sphi 0, %s246
    %s261 = sphi 0, %s247
    %s265 = sphi 0, %s265
    %s267 = sphi 0, %s265
    %s268 = sphi 0, %s267
    %s282 = sphi 0, %s268
    %s286 = sphi 0, %s286
    %s288 = sphi 0, %s286
    %s289 = sphi 0, %s288
    %s303 = sphi 0, %s289
    %s309 = sphi 0, %s311
    %s312 = sphi 0, %s309
    %s313 = sphi 0, %s312
    %s329 = sphi 0, %s313
  $region4: #{mdm_forward.2} parent=0 // loop_header_branch
    %24 = sbr.rel (%p22) target = $region8
  $region5: #{mdm_forward.2} parent=0 // loop_body
    %s26 = ssub.s32 %s21, 1
    %s27 = ssub.s32 %s21, 2
    %s28 = sadd.s32 %s21, 1
    %s29 = ssub.s32 %s21, %s28
    %p30 = scmp.eq.s32.totalorder %s29, 0
    %s32 = sadd.s32 %s31, 1
    %s33 = scalar_select %p30, %s31, %s32
    %p36 = pneg %p30
    %p37 = scmp.eq.s32.totalorder %s21, 1
    %p38 = por %p36, %p37
    %p39 = scmp.ne.s32.totalorder %s31, %s34
    %p40 = scmp.eq.s32.totalorder %s21, 0
    %p41 = por %p39, %p40
    %p42 = scmp.ne.s32.totalorder %s31, %s34
    %p43 = scmp.eq.s32.totalorder %s26, 1
    %p44 = por %p42, %p43
    %p45 = scmp.ne.s32.totalorder %s34, %s35
    %p46 = scmp.eq.s32.totalorder %s26, 0
    %p47 = por %p45, %p46
    %p48 = scmp.ne.s32.totalorder %s34, %s35
    %p49 = scmp.eq.s32.totalorder %s27, 1
    %p50 = por %p48, %p49
    %p52 = scmp.ne.s32.totalorder %s35, %s51
    %p53 = scmp.eq.s32.totalorder %s27, 0
    %p54 = por %p52, %p53
    %s56 = sadd.s32 %s55, 1
    %p59 = scmp.eq.s32.totalorder %s21, 1
    %p60 = scmp.ne.s32.totalorder %s55, %s57
    %p61 = scmp.eq.s32.totalorder %s21, 0
    %p62 = por %p60, %p61
    %p63 = scmp.ne.s32.totalorder %s55, %s57
    %p64 = scmp.eq.s32.totalorder %s26, 1
    %p65 = por %p63, %p64
    %p66 = scmp.ne.s32.totalorder %s57, %s58
    %p67 = scmp.eq.s32.totalorder %s26, 0
    %p68 = por %p66, %p67
    %p69 = scmp.ne.s32.totalorder %s57, %s58
    %p70 = scmp.eq.s32.totalorder %s27, 1
    %p71 = por %p69, %p70
    %p73 = scmp.ne.s32.totalorder %s58, %s72
    %p74 = scmp.eq.s32.totalorder %s27, 0
    %p75 = por %p73, %p74
    %s77 = sadd.s32 %s76, 1
    %p80 = scmp.eq.s32.totalorder %s21, 1
    %p81 = scmp.ne.s32.totalorder %s76, %s78
    %p82 = scmp.eq.s32.totalorder %s21, 0
    %p83 = por %p81, %p82
    %p84 = scmp.ne.s32.totalorder %s76, %s78
    %p85 = scmp.eq.s32.totalorder %s26, 1
    %p86 = por %p84, %p85
    %p87 = scmp.ne.s32.totalorder %s78, %s79
    %p88 = scmp.eq.s32.totalorder %s26, 0
    %p89 = por %p87, %p88
    %p90 = scmp.ne.s32.totalorder %s78, %s79
    %p91 = scmp.eq.s32.totalorder %s27, 1
    %p92 = por %p90, %p91
    %p94 = scmp.ne.s32.totalorder %s79, %s93
    %p95 = scmp.eq.s32.totalorder %s27, 0
    %p96 = por %p94, %p95
    %s98 = sadd.s32 %s97, 1
    %p101 = scmp.eq.s32.totalorder %s21, 1
    %p102 = scmp.ne.s32.totalorder %s97, %s99
    %p103 = scmp.eq.s32.totalorder %s21, 0
    %p104 = por %p102, %p103
    %p105 = scmp.ne.s32.totalorder %s97, %s99
    %p106 = scmp.eq.s32.totalorder %s26, 1
    %p107 = por %p105, %p106
    %p108 = scmp.ne.s32.totalorder %s99, %s100
    %p109 = scmp.eq.s32.totalorder %s26, 0
    %p110 = por %p108, %p109
    %p111 = scmp.ne.s32.totalorder %s99, %s100
    %p112 = scmp.eq.s32.totalorder %s27, 1
    %p113 = por %p111, %p112
    %p115 = scmp.ne.s32.totalorder %s100, %s114
    %p116 = scmp.eq.s32.totalorder %s27, 0
    %p117 = por %p115, %p116
    %s119 = sadd.s32 %s118, 1
    %p122 = scmp.eq.s32.totalorder %s21, 1
    %p123 = scmp.ne.s32.totalorder %s118, %s120
    %p124 = scmp.eq.s32.totalorder %s21, 0
    %p125 = por %p123, %p124
    %p126 = scmp.ne.s32.totalorder %s118, %s120
    %p127 = scmp.eq.s32.totalorder %s26, 1
    %p128 = por %p126, %p127
    %p129 = scmp.ne.s32.totalorder %s120, %s121
    %p130 = scmp.eq.s32.totalorder %s26, 0
    %p131 = por %p129, %p130
    %p132 = scmp.ne.s32.totalorder %s120, %s121
    %p133 = scmp.eq.s32.totalorder %s27, 1
    %p134 = por %p132, %p133
    %p136 = scmp.ne.s32.totalorder %s121, %s135
    %p137 = scmp.eq.s32.totalorder %s27, 0
    %p138 = por %p136, %p137
    %s140 = sadd.s32 %s139, 1
    %p143 = scmp.eq.s32.totalorder %s21, 1
    %p144 = scmp.ne.s32.totalorder %s139, %s141
    %p145 = scmp.eq.s32.totalorder %s21, 0
    %p146 = por %p144, %p145
    %p147 = scmp.ne.s32.totalorder %s139, %s141
    %p148 = scmp.eq.s32.totalorder %s26, 1
    %p149 = por %p147, %p148
    %p150 = scmp.ne.s32.totalorder %s141, %s142
    %p151 = scmp.eq.s32.totalorder %s26, 0
    %p152 = por %p150, %p151
    %p153 = scmp.ne.s32.totalorder %s141, %s142
    %p154 = scmp.eq.s32.totalorder %s27, 1
    %p155 = por %p153, %p154
    %p157 = scmp.ne.s32.totalorder %s142, %s156
    %p158 = scmp.eq.s32.totalorder %s27, 0
    %p159 = por %p157, %p158
    %s161 = sadd.s32 %s160, 1
    %p164 = scmp.eq.s32.totalorder %s21, 1
    %p165 = scmp.ne.s32.totalorder %s160, %s162
    %p166 = scmp.eq.s32.totalorder %s21, 0
    %p167 = por %p165, %p166
    %p168 = scmp.ne.s32.totalorder %s160, %s162
    %p169 = scmp.eq.s32.totalorder %s26, 1
    %p170 = por %p168, %p169
    %p171 = scmp.ne.s32.totalorder %s162, %s163
    %p172 = scmp.eq.s32.totalorder %s26, 0
    %p173 = por %p171, %p172
    %p174 = scmp.ne.s32.totalorder %s162, %s163
    %p175 = scmp.eq.s32.totalorder %s27, 1
    %p176 = por %p174, %p175
    %p178 = scmp.ne.s32.totalorder %s163, %s177
    %p179 = scmp.eq.s32.totalorder %s27, 0
    %p180 = por %p178, %p179
    %s182 = sadd.s32 %s181, 1
    %p185 = scmp.eq.s32.totalorder %s21, 1
    %p186 = scmp.ne.s32.totalorder %s181, %s183
    %p187 = scmp.eq.s32.totalorder %s21, 0
    %p188 = por %p186, %p187
    %p189 = scmp.ne.s32.totalorder %s181, %s183
    %p190 = scmp.eq.s32.totalorder %s26, 1
    %p191 = por %p189, %p190
    %p192 = scmp.ne.s32.totalorder %s183, %s184
    %p193 = scmp.eq.s32.totalorder %s26, 0
    %p194 = por %p192, %p193
    %p195 = scmp.ne.s32.totalorder %s183, %s184
    %p196 = scmp.eq.s32.totalorder %s27, 1
    %p197 = por %p195, %p196
    %p199 = scmp.ne.s32.totalorder %s184, %s198
    %p200 = scmp.eq.s32.totalorder %s27, 0
    %p201 = por %p199, %p200
    %s203 = sadd.s32 %s202, 1
    %p206 = scmp.eq.s32.totalorder %s21, 1
    %p207 = scmp.ne.s32.totalorder %s202, %s204
    %p208 = scmp.eq.s32.totalorder %s21, 0
    %p209 = por %p207, %p208
    %p210 = scmp.ne.s32.totalorder %s202, %s204
    %p211 = scmp.eq.s32.totalorder %s26, 1
    %p212 = por %p210, %p211
    %p213 = scmp.ne.s32.totalorder %s204, %s205
    %p214 = scmp.eq.s32.totalorder %s26, 0
    %p215 = por %p213, %p214
    %p216 = scmp.ne.s32.totalorder %s204, %s205
    %p217 = scmp.eq.s32.totalorder %s27, 1
    %p218 = por %p216, %p217
    %p220 = scmp.ne.s32.totalorder %s205, %s219
    %p221 = scmp.eq.s32.totalorder %s27, 0
    %p222 = por %p220, %p221
    %s224 = sadd.s32 %s223, 1
    %p227 = scmp.eq.s32.totalorder %s21, 1
    %p228 = scmp.ne.s32.totalorder %s223, %s225
    %p229 = scmp.eq.s32.totalorder %s21, 0
    %p230 = por %p228, %p229
    %p231 = scmp.ne.s32.totalorder %s223, %s225
    %p232 = scmp.eq.s32.totalorder %s26, 1
    %p233 = por %p231, %p232
    %p234 = scmp.ne.s32.totalorder %s225, %s226
    %p235 = scmp.eq.s32.totalorder %s26, 0
    %p236 = por %p234, %p235
    %p237 = scmp.ne.s32.totalorder %s225, %s226
    %p238 = scmp.eq.s32.totalorder %s27, 1
    %p239 = por %p237, %p238
    %p241 = scmp.ne.s32.totalorder %s226, %s240
    %p242 = scmp.eq.s32.totalorder %s27, 0
    %p243 = por %p241, %p242
    %s245 = sadd.s32 %s244, 1
    %p248 = scmp.eq.s32.totalorder %s21, 1
    %p249 = scmp.ne.s32.totalorder %s244, %s246
    %p250 = scmp.eq.s32.totalorder %s21, 0
    %p251 = por %p249, %p250
    %p252 = scmp.ne.s32.totalorder %s244, %s246
    %p253 = scmp.eq.s32.totalorder %s26, 1
    %p254 = por %p252, %p253
    %p255 = scmp.ne.s32.totalorder %s246, %s247
    %p256 = scmp.eq.s32.totalorder %s26, 0
    %p257 = por %p255, %p256
    %p258 = scmp.ne.s32.totalorder %s246, %s247
    %p259 = scmp.eq.s32.totalorder %s27, 1
    %p260 = por %p258, %p259
    %p262 = scmp.ne.s32.totalorder %s247, %s261
    %p263 = scmp.eq.s32.totalorder %s27, 0
    %p264 = por %p262, %p263
    %s266 = sadd.s32 %s265, 1
    %p269 = scmp.eq.s32.totalorder %s21, 1
    %p270 = scmp.ne.s32.totalorder %s265, %s267
    %p271 = scmp.eq.s32.totalorder %s21, 0
    %p272 = por %p270, %p271
    %p273 = scmp.ne.s32.totalorder %s265, %s267
    %p274 = scmp.eq.s32.totalorder %s26, 1
    %p275 = por %p273, %p274
    %p276 = scmp.ne.s32.totalorder %s267, %s268
    %p277 = scmp.eq.s32.totalorder %s26, 0
    %p278 = por %p276, %p277
    %p279 = scmp.ne.s32.totalorder %s267, %s268
    %p280 = scmp.eq.s32.totalorder %s27, 1
    %p281 = por %p279, %p280
    %p283 = scmp.ne.s32.totalorder %s268, %s282
    %p284 = scmp.eq.s32.totalorder %s27, 0
    %p285 = por %p283, %p284
    %s287 = sadd.s32 %s286, 1
    %p290 = scmp.eq.s32.totalorder %s21, 1
    %p291 = scmp.ne.s32.totalorder %s286, %s288
    %p292 = scmp.eq.s32.totalorder %s21, 0
    %p293 = por %p291, %p292
    %p294 = scmp.ne.s32.totalorder %s286, %s288
    %p295 = scmp.eq.s32.totalorder %s26, 1
    %p296 = por %p294, %p295
    %p297 = scmp.ne.s32.totalorder %s288, %s289
    %p298 = scmp.eq.s32.totalorder %s26, 0
    %p299 = por %p297, %p298
    %p300 = scmp.ne.s32.totalorder %s288, %s289
    %p301 = scmp.eq.s32.totalorder %s27, 1
    %p302 = por %p300, %p301
    %p304 = scmp.ne.s32.totalorder %s289, %s303
    %p305 = scmp.eq.s32.totalorder %s27, 0
    %p306 = por %p304, %p305
    %s307 = ssub.s32 %s21, %s28
    %p308 = scmp.eq.s32.totalorder %s307, 0
    %s310 = sadd.s32 %s309, 1
    %s311 = scalar_select %p308, %s309, %s310
    %p314 = pneg %p308
    %p315 = scmp.eq.s32.totalorder %s21, 1
    %p316 = por %p314, %p315
    %p317 = scmp.ne.s32.totalorder %s309, %s312
    %p318 = scmp.eq.s32.totalorder %s21, 0
    %p319 = por %p317, %p318
    %p320 = scmp.ne.s32.totalorder %s309, %s312
    %p321 = scmp.eq.s32.totalorder %s26, 1
    %p322 = por %p320, %p321
    %p323 = scmp.ne.s32.totalorder %s312, %s313
    %p324 = scmp.eq.s32.totalorder %s26, 0
    %p325 = por %p323, %p324
    %p326 = scmp.ne.s32.totalorder %s312, %s313
    %p327 = scmp.eq.s32.totalorder %s27, 1
    %p328 = por %p326, %p327
    %p330 = scmp.ne.s32.totalorder %s313, %s329
    %p331 = scmp.eq.s32.totalorder %s27, 0
    %p332 = por %p330, %p331
    %p333 = scmp.le.s32.totalorder 1, %s21
    %p334 = scmp.lt.s32.totalorder %s21, 3
    %p335 = pnand %p333, %p334
    %p336 = pneg %p335
    // Predicated region
    $region9: #{mdm_forward.2} parent=5 // pred_check
      _
    $region10: #{mdm_forward.2} parent=5 // pred_check_branch
      %338 = sbr.rel (%p335) target = $region12
    $region11: #{mdm_forward.2} parent=5 // pred_region
      %s339 = ssub.s32 %s21, 1
      // Predicated region
      $region13: #{mdm_forward.2} parent=11 // pred_check
        %p340 = pneg %p68
      $region14: #{mdm_forward.2} parent=11 // pred_check_branch
        %342 = sbr.rel (%p340) target = $region16
      $region15: #{mdm_forward.2} parent=11 // pred_region
        _
      $region16: #{mdm_forward.2} parent=11 // pred_fallthru
        _
      // Predicated region
      $region17: #{mdm_forward.2} parent=11 // pred_check
        %p343 = pneg %p89
      $region18: #{mdm_forward.2} parent=11 // pred_check_branch
        %345 = sbr.rel (%p343) target = $region20
      $region19: #{mdm_forward.2} parent=11 // pred_region
        _
      $region20: #{mdm_forward.2} parent=11 // pred_fallthru
        _
      // Predicated region
      $region21: #{mdm_forward.2} parent=11 // pred_check
        %p346 = pneg %p110
      $region22: #{mdm_forward.2} parent=11 // pred_check_branch
        %348 = sbr.rel (%p346) target = $region24
      $region23: #{mdm_forward.2} parent=11 // pred_region
        _
      $region24: #{mdm_forward.2} parent=11 // pred_fallthru
        _
      // Predicated region
      $region25: #{mdm_forward.2} parent=11 // pred_check
        %p349 = pneg %p131
      $region26: #{mdm_forward.2} parent=11 // pred_check_branch
        %351 = sbr.rel (%p349) target = $region28
      $region27: #{mdm_forward.2} parent=11 // pred_region
        _
      $region28: #{mdm_forward.2} parent=11 // pred_fallthru
        _
      // Predicated region
      $region29: #{mdm_forward.2} parent=11 // pred_check
        %p352 = pneg %p152
      $region30: #{mdm_forward.2} parent=11 // pred_check_branch
        %354 = sbr.rel (%p352) target = $region32
      $region31: #{mdm_forward.2} parent=11 // pred_region
        _
      $region32: #{mdm_forward.2} parent=11 // pred_fallthru
        _
      // Predicated region
      $region33: #{mdm_forward.2} parent=11 // pred_check
        %p355 = pneg %p173
      $region34: #{mdm_forward.2} parent=11 // pred_check_branch
        %357 = sbr.rel (%p355) target = $region36
      $region35: #{mdm_forward.2} parent=11 // pred_region
        _
      $region36: #{mdm_forward.2} parent=11 // pred_fallthru
        _
      // Predicated region
      $region37: #{mdm_forward.2} parent=11 // pred_check
        %p358 = pneg %p194
      $region38: #{mdm_forward.2} parent=11 // pred_check_branch
        %360 = sbr.rel (%p358) target = $region40
      $region39: #{mdm_forward.2} parent=11 // pred_region
        _
      $region40: #{mdm_forward.2} parent=11 // pred_fallthru
        _
      // Predicated region
      $region41: #{mdm_forward.2} parent=11 // pred_check
        %p361 = pneg %p215
      $region42: #{mdm_forward.2} parent=11 // pred_check_branch
        %363 = sbr.rel (%p361) target = $region44
      $region43: #{mdm_forward.2} parent=11 // pred_region
        _
      $region44: #{mdm_forward.2} parent=11 // pred_fallthru
        _
      // Predicated region
      $region45: #{mdm_forward.2} parent=11 // pred_check
        %p364 = pneg %p236
      $region46: #{mdm_forward.2} parent=11 // pred_check_branch
        %366 = sbr.rel (%p364) target = $region48
      $region47: #{mdm_forward.2} parent=11 // pred_region
        _
      $region48: #{mdm_forward.2} parent=11 // pred_fallthru
        _
      // Predicated region
      $region49: #{mdm_forward.2} parent=11 // pred_check
        %p367 = pneg %p257
      $region50: #{mdm_forward.2} parent=11 // pred_check_branch
        %369 = sbr.rel (%p367) target = $region52
      $region51: #{mdm_forward.2} parent=11 // pred_region
        _
      $region52: #{mdm_forward.2} parent=11 // pred_fallthru
        _
      // Predicated region
      $region53: #{mdm_forward.2} parent=11 // pred_check
        %p370 = pneg %p278
      $region54: #{mdm_forward.2} parent=11 // pred_check_branch
        %372 = sbr.rel (%p370) target = $region56
      $region55: #{mdm_forward.2} parent=11 // pred_region
        _
      $region56: #{mdm_forward.2} parent=11 // pred_fallthru
        _
      // Predicated region
      $region57: #{mdm_forward.2} parent=11 // pred_check
        %p373 = pneg %p299
      $region58: #{mdm_forward.2} parent=11 // pred_check_branch
        %375 = sbr.rel (%p373) target = $region60
      $region59: #{mdm_forward.2} parent=11 // pred_region
        _
      $region60: #{mdm_forward.2} parent=11 // pred_fallthru
        _
    $region12: #{mdm_forward.2} parent=5 // pred_fallthru
      _
    %p376 = scmp.lt.s32.totalorder %s21, 2
    // Predicated region
    $region61: #{mdm_forward.2} parent=5 // pred_check
      %p377 = pneg %p376
    $region62: #{mdm_forward.2} parent=5 // pred_check_branch
      %379 = sbr.rel (%p377) target = $region64
    $region63: #{mdm_forward.2} parent=5 // pred_region
      // Predicated region
      $region65: #{mdm_forward.2} parent=63 // pred_check
        %p380 = pneg %p41
      $region66: #{mdm_forward.2} parent=63 // pred_check_branch
        %382 = sbr.rel (%p380) target = $region68
      $region67: #{mdm_forward.2} parent=63 // pred_region
        %p383 = scmp.lt.s32.totalorder %s21, 1
        %s384 = scalar_select %p383, %s21, 1
        %s385 = smul.addr %s384, 2
        %s386 = smul.addr %s385, 4
        %s387 = scalar_lea.vmem %s1, %s386
      $region68: #{mdm_forward.2} parent=63 // pred_fallthru
        _
    $region64: #{mdm_forward.2} parent=5 // pred_fallthru
      _
    %p388 = scmp.le.s32.totalorder 1, %s21
    %p389 = scmp.lt.s32.totalorder %s21, 3
    %p390 = pnand %p388, %p389
    %p391 = pneg %p390
    // Predicated region
    $region69: #{mdm_forward.2} parent=5 // pred_check
      _
    $region70: #{mdm_forward.2} parent=5 // pred_check_branch
      %393 = sbr.rel (%p390) target = $region72
    $region71: #{mdm_forward.2} parent=5 // pred_region
      %s394 = ssub.s32 %s21, 1
      %p395 = scmp.lt.s32.totalorder %s26, 1
      %s396 = scalar_select %p395, %s26, 1
      %s397 = smul.addr %s396, 2
      %s398 = smul.addr %s397, 4
      %s399 = scalar_lea.vmem %s1, %s398
      %p400 = pneg %p47
      %p401 = pneg %p44
      %p402 = pneg %p68
      %p403 = pneg %p65
      %p404 = pneg %p89
      %p405 = pneg %p86
      %p406 = pneg %p110
      %p407 = pneg %p107
      %p408 = pneg %p131
      %p409 = pneg %p128
      %p410 = pneg %p152
      %p411 = pneg %p149
      %p412 = pneg %p173
      %p413 = pneg %p170
      %p414 = pneg %p194
      %p415 = pneg %p191
      %p416 = pneg %p215
      %p417 = pneg %p212
      %p418 = pneg %p236
      %p419 = pneg %p233
      %p420 = pneg %p257
      %p421 = pneg %p254
      %p422 = pneg %p278
      %p423 = pneg %p275
      %p424 = pneg %p299
      %p425 = pneg %p296
      %p426 = pneg %p325
      %p427 = pneg %p322
      %p428 = scmp.lt.s32.totalorder %s26, 1
      %s429 = scalar_select %p428, %s26, 1
      %s430 = smul.addr %s429, 2
      %s431 = smul.addr %s430, 4
      %s432 = scalar_lea.vmem %s14, %s431
      %p433 = scmp.lt.s32.totalorder %s26, 1
      %s434 = scalar_select %p433, %s26, 1
      %s435 = smul.addr %s434, 2
      %s436 = smul.addr %s435, 4
      %s437 = scalar_lea.vmem %s1, %s436
      %p438 = scmp.lt.s32.totalorder %s26, 1
      %s439 = scalar_select %p438, %s26, 1
      %s440 = smul.addr %s439, 2
      %s441 = smul.addr %s440, 4
      %s442 = scalar_lea.vmem %s14, %s441
      %v444 = vld [vmem:[%s437] sm:$0xf]
      %v445 = vld [vmem:[%s437 + $0x4] sm:$0xf]
      %v446 = vunpack.c.l.bf16 %v444
      %v447 = vunpack.c.l.bf16 %v445
      %v448 = vld [vmem:[%s2] sm:$0xf]
      %v449 = vld [vmem:[%s2 + $0x4] sm:$0xf]
      %v450 = vld [vmem:[%s2 + $0x8] sm:$0xf]
      %v451 = vld [vmem:[%s2 + $0xc] sm:$0xf]
      %v452 = vld [vmem:[%s3] sm:$0x1]
      %v454 = vlaneseq
      %v455 = vshrl.u32 %v454, 7
      %v456 = vsub.s32 0, %v455
      %v457 = vrot.slane %v452, %v456
      %v461 = vunpack.c.l.b16 %v444
      %v462 = vunpack.c.l.b16 %v445
      %v463 = vpack.c.b16 %v462, %v461
      %v468 = vunpack.c.l.b16 %v448
      %v469 = vunpack.c.l.b16 %v449
      %v470 = vunpack.c.l.b16 %v450
      %v471 = vunpack.c.l.b16 %v451
      %v472 = vpack.c.b16 %v469, %v468
      %v473 = vpack.c.b16 %v471, %v470
      %vm476 = vcmask 261120
      %v478 = vsel %vm476, %v463, 0
      %480 = vmatprep.subr.bf16.mxu0 0
      %481 = vmatpush1.bf16.msra.mxu0 %v472
      %482 = vmatprep.subr.bf16.mxu0 0
      %483 = vmatpush1.bf16.msra.mxu0 %v473
      %484 = vmatprep.subr.bf16.mxu0 0
      %485 = vmatpush1.bf16.msra.mxu0 0
      %486 = vmatprep.subr.bf16.mxu0 0
      %487 = vmatpush1.bf16.msra.mxu0 0
      %488 = vmatprep.subr.bf16.mxu0 0
      %489 = vmatpush1.bf16.msra.mxu0 0
      %490 = vmatprep.subr.bf16.mxu0 0
      %491 = vmatpush1.bf16.msra.mxu0 0
      %492 = vmatprep.subr.bf16.mxu0 0
      %493 = vmatpush1.bf16.msra.mxu0 0
      %494 = vmatprep.subr.bf16.mxu0 0
      %495 = vmatpush1.bf16.msra.mxu0 0
      %496 = vmatprep.subr.bf16.mxu0 0
      %497 = vmatpush1.bf16.msra.mxu0 0
      %498 = vmatprep.subr.bf16.mxu0 0
      %499 = vmatpush1.bf16.msra.mxu0 0
      %500 = vmatprep.subr.bf16.mxu0 0
      %501 = vmatpush1.bf16.msra.mxu0 0
      %502 = vmatprep.subr.bf16.mxu0 0
      %503 = vmatpush1.bf16.msra.mxu0 0
      %504 = vmatprep.subr.bf16.mxu0 0
      %505 = vmatpush1.bf16.msra.mxu0 0
      %506 = vmatprep.subr.bf16.mxu0 0
      %507 = vmatpush1.bf16.msra.mxu0 0
      %508 = vmatprep.subr.bf16.mxu0 0
      %509 = vmatpush1.bf16.msra.mxu0 0
      %510 = vmatprep.subr.bf16.mxu0 0
      %511 = vmatpush1.bf16.msra.mxu0 0
      %512 = vmatprep.mubr.bf16.mxu0 0
      %513 = vmatmul.mubr.bf16.gmra.mrb[0].mxu0 %v478
      %v514 = vpop.f32.mrb[0].mxu0
      %v515 = vadd.f32 %v457, %v514
      %v516 = vpop.f32.mrb[0].mxu0
      %v517 = vpop.f32.mrb[0].mxu0
      %v518 = vadd.f32 %v457, %v517
      %v519 = vpop.f32.mrb[0].mxu0
      %520 = vdwg.mxu0
      %523 = vrot.lane.b32.xlu0 %v515, 120
      %v524 = vpop.permute.xlu0 %523
      %525 = vrot.lane.b32.xlu0 %v518, 120
      %v526 = vpop.permute.xlu0 %525
      %529 = vrot.lane.b32.xlu0 %v515, 112
      %v530 = vpop.permute.xlu0 %529
      %531 = vrot.lane.b32.xlu0 %v518, 112
      %v532 = vpop.permute.xlu0 %531
      %535 = vrot.lane.b32.xlu0 %v515, 104
      %v536 = vpop.permute.xlu0 %535
      %537 = vrot.lane.b32.xlu0 %v518, 104
      %v538 = vpop.permute.xlu0 %537
      %v541 = vcombine.low %v515, %v530
      %v542 = vcombine.high %v515, %v530
      %v544 = vunpack.c.l.s4 1983009808
      %v545 = vunpack.c.0.s8 %v544
      %v546 = vlaneseq
      %v547 = vshrl.u32 %v546, 7
      %v548 = vsub.s32 %v545, %v547
      %v549 = vrot.slane %v541, %v548
      %v551 = vunpack.c.l.s4 1983009808
      %v552 = vunpack.c.0.s8 %v551
      %v553 = vlaneseq
      %v554 = vshrl.u32 %v553, 7
      %v555 = vsub.s32 %v552, %v554
      %v556 = vrot.slane %v542, %v555
      %v557 = vcombine.low %v524, %v536
      %v558 = vcombine.high %v524, %v536
      %v560 = vunpack.c.l.s4 1983009808
      %v561 = vunpack.c.0.s8 %v560
      %v562 = vlaneseq
      %v563 = vshrl.u32 %v562, 7
      %v564 = vsub.s32 %v561, %v563
      %v565 = vrot.slane %v557, %v564
      %v567 = vunpack.c.l.s4 1983009808
      %v568 = vunpack.c.0.s8 %v567
      %v569 = vlaneseq
      %v570 = vshrl.u32 %v569, 7
      %v571 = vsub.s32 %v568, %v570
      %v572 = vrot.slane %v558, %v571
      %v573 = vcombine.low %v549, %v565
      %v574 = vcombine.high %v549, %v565
      %v576 = vunpack.c.l.s4 1934713408
      %v577 = vunpack.c.0.s8 %v576
      %v578 = vlaneseq
      %v579 = vshrl.u32 %v578, 7
      %v580 = vsub.s32 %v577, %v579
      %v581 = vrot.slane %v573, %v580
      %v583 = vunpack.c.l.s4 1934713408
      %v584 = vunpack.c.0.s8 %v583
      %v585 = vlaneseq
      %v586 = vshrl.u32 %v585, 7
      %v587 = vsub.s32 %v584, %v586
      %v588 = vrot.slane %v574, %v587
      %v589 = vcombine.low %v556, %v572
      %v590 = vcombine.high %v556, %v572
      %v592 = vunpack.c.l.s4 1934713408
      %v593 = vunpack.c.0.s8 %v592
      %v594 = vlaneseq
      %v595 = vshrl.u32 %v594, 7
      %v596 = vsub.s32 %v593, %v595
      %v597 = vrot.slane %v589, %v596
      %v599 = vunpack.c.l.s4 1934713408
      %v600 = vunpack.c.0.s8 %v599
      %v601 = vlaneseq
      %v602 = vshrl.u32 %v601, 7
      %v603 = vsub.s32 %v600, %v602
      %v604 = vrot.slane %v590, %v603
      %v605 = vcombine.high %v581, 0.0
      %v606 = vcombine.high %v588, 0.0
      %v607 = vcombine.high %v597, 0.0
      %v608 = vcombine.high %v604, 0.0
      %v609 = vcombine.low %v518, %v532
      %v610 = vcombine.high %v518, %v532
      %v612 = vunpack.c.l.s4 1983009808
      %v613 = vunpack.c.0.s8 %v612
      %v614 = vlaneseq
      %v615 = vshrl.u32 %v614, 7
      %v616 = vsub.s32 %v613, %v615
      %v617 = vrot.slane %v609, %v616
      %v619 = vunpack.c.l.s4 1983009808
      %v620 = vunpack.c.0.s8 %v619
      %v621 = vlaneseq
      %v622 = vshrl.u32 %v621, 7
      %v623 = vsub.s32 %v620, %v622
      %v624 = vrot.slane %v610, %v623
      %v625 = vcombine.low %v526, %v538
      %v626 = vcombine.high %v526, %v538
      %v628 = vunpack.c.l.s4 1983009808
      %v629 = vunpack.c.0.s8 %v628
      %v630 = vlaneseq
      %v631 = vshrl.u32 %v630, 7
      %v632 = vsub.s32 %v629, %v631
      %v633 = vrot.slane %v625, %v632
      %v635 = vunpack.c.l.s4 1983009808
      %v636 = vunpack.c.0.s8 %v635
      %v637 = vlaneseq
      %v638 = vshrl.u32 %v637, 7
      %v639 = vsub.s32 %v636, %v638
      %v640 = vrot.slane %v626, %v639
      %v641 = vcombine.low %v617, %v633
      %v642 = vcombine.high %v617, %v633
      %v644 = vunpack.c.l.s4 1934713408
      %v645 = vunpack.c.0.s8 %v644
      %v646 = vlaneseq
      %v647 = vshrl.u32 %v646, 7
      %v648 = vsub.s32 %v645, %v647
      %v649 = vrot.slane %v641, %v648
      %v651 = vunpack.c.l.s4 1934713408
      %v652 = vunpack.c.0.s8 %v651
      %v653 = vlaneseq
      %v654 = vshrl.u32 %v653, 7
      %v655 = vsub.s32 %v652, %v654
      %v656 = vrot.slane %v642, %v655
      %v657 = vcombine.low %v624, %v640
      %v658 = vcombine.high %v624, %v640
      %v660 = vunpack.c.l.s4 1934713408
      %v661 = vunpack.c.0.s8 %v660
      %v662 = vlaneseq
      %v663 = vshrl.u32 %v662, 7
      %v664 = vsub.s32 %v661, %v663
      %v665 = vrot.slane %v657, %v664
      %v667 = vunpack.c.l.s4 1934713408
      %v668 = vunpack.c.0.s8 %v667
      %v669 = vlaneseq
      %v670 = vshrl.u32 %v669, 7
      %v671 = vsub.s32 %v668, %v670
      %v672 = vrot.slane %v658, %v671
      %v673 = vcombine.high %v649, 0.0
      %v674 = vcombine.high %v656, 0.0
      %v675 = vcombine.high %v665, 0.0
      %v676 = vcombine.high %v672, 0.0
      %v677 = vcombine.low %v581, %v588
      %v679 = vunpack.c.l.s4 1983009808
      %v680 = vunpack.c.0.s8 %v679
      %v681 = vlaneseq
      %v682 = vshrl.u32 %v681, 7
      %v683 = vsub.s32 %v680, %v682
      %v684 = vrot.slane %v677, %v683
      %v685 = vcombine.low %v605, %v606
      %v687 = vunpack.c.l.s4 1983009808
      %v688 = vunpack.c.0.s8 %v687
      %v689 = vlaneseq
      %v690 = vshrl.u32 %v689, 7
      %v691 = vsub.s32 %v688, %v690
      %v692 = vrot.slane %v685, %v691
      %v693 = vcombine.low %v597, %v604
      %v695 = vunpack.c.l.s4 1983009808
      %v696 = vunpack.c.0.s8 %v695
      %v697 = vlaneseq
      %v698 = vshrl.u32 %v697, 7
      %v699 = vsub.s32 %v696, %v698
      %v700 = vrot.slane %v693, %v699
      %v701 = vcombine.low %v607, %v608
      %v703 = vunpack.c.l.s4 1983009808
      %v704 = vunpack.c.0.s8 %v703
      %v705 = vlaneseq
      %v706 = vshrl.u32 %v705, 7
      %v707 = vsub.s32 %v704, %v706
      %v708 = vrot.slane %v701, %v707
      %v709 = vcombine.low %v684, %v692
      %v710 = vcombine.high %v684, %v692
      %v712 = vunpack.c.l.s4 1934713408
      %v713 = vunpack.c.0.s8 %v712
      %v714 = vlaneseq
      %v715 = vshrl.u32 %v714, 7
      %v716 = vsub.s32 %v713, %v715
      %v717 = vrot.slane %v709, %v716
      %v719 = vunpack.c.l.s4 1934713408
      %v720 = vunpack.c.0.s8 %v719
      %v721 = vlaneseq
      %v722 = vshrl.u32 %v721, 7
      %v723 = vsub.s32 %v720, %v722
      %v724 = vrot.slane %v710, %v723
      %v725 = vcombine.low %v700, %v708
      %v726 = vcombine.high %v700, %v708
      %v728 = vunpack.c.l.s4 1934713408
      %v729 = vunpack.c.0.s8 %v728
      %v730 = vlaneseq
      %v731 = vshrl.u32 %v730, 7
      %v732 = vsub.s32 %v729, %v731
      %v733 = vrot.slane %v725, %v732
      %v735 = vunpack.c.l.s4 1934713408
      %v736 = vunpack.c.0.s8 %v735
      %v737 = vlaneseq
      %v738 = vshrl.u32 %v737, 7
      %v739 = vsub.s32 %v736, %v738
      %v740 = vrot.slane %v726, %v739
      %v741 = vcombine.low %v717, %v733
      %v742 = vcombine.high %v717, %v733
      %v743 = vcombine.low %v724, %v740
      %v744 = vcombine.high %v724, %v740
      %v745 = vcombine.low %v649, %v656
      %v747 = vunpack.c.l.s4 1983009808
      %v748 = vunpack.c.0.s8 %v747
      %v749 = vlaneseq
      %v750 = vshrl.u32 %v749, 7
      %v751 = vsub.s32 %v748, %v750
      %v752 = vrot.slane %v745, %v751
      %v753 = vcombine.low %v673, %v674
      %v755 = vunpack.c.l.s4 1983009808
      %v756 = vunpack.c.0.s8 %v755
      %v757 = vlaneseq
      %v758 = vshrl.u32 %v757, 7
      %v759 = vsub.s32 %v756, %v758
      %v760 = vrot.slane %v753, %v759
      %v761 = vcombine.low %v665, %v672
      %v763 = vunpack.c.l.s4 1983009808
      %v764 = vunpack.c.0.s8 %v763
      %v765 = vlaneseq
      %v766 = vshrl.u32 %v765, 7
      %v767 = vsub.s32 %v764, %v766
      %v768 = vrot.slane %v761, %v767
      %v769 = vcombine.low %v675, %v676
      %v771 = vunpack.c.l.s4 1983009808
      %v772 = vunpack.c.0.s8 %v771
      %v773 = vlaneseq
      %v774 = vshrl.u32 %v773, 7
      %v775 = vsub.s32 %v772, %v774
      %v776 = vrot.slane %v769, %v775
      %v777 = vcombine.low %v752, %v760
      %v778 = vcombine.high %v752, %v760
      %v780 = vunpack.c.l.s4 1934713408
      %v781 = vunpack.c.0.s8 %v780
      %v782 = vlaneseq
      %v783 = vshrl.u32 %v782, 7
      %v784 = vsub.s32 %v781, %v783
      %v785 = vrot.slane %v777, %v784
      %v787 = vunpack.c.l.s4 1934713408
      %v788 = vunpack.c.0.s8 %v787
      %v789 = vlaneseq
      %v790 = vshrl.u32 %v789, 7
      %v791 = vsub.s32 %v788, %v790
      %v792 = vrot.slane %v778, %v791
      %v793 = vcombine.low %v768, %v776
      %v794 = vcombine.high %v768, %v776
      %v796 = vunpack.c.l.s4 1934713408
      %v797 = vunpack.c.0.s8 %v796
      %v798 = vlaneseq
      %v799 = vshrl.u32 %v798, 7
      %v800 = vsub.s32 %v797, %v799
      %v801 = vrot.slane %v793, %v800
      %v803 = vunpack.c.l.s4 1934713408
      %v804 = vunpack.c.0.s8 %v803
      %v805 = vlaneseq
      %v806 = vshrl.u32 %v805, 7
      %v807 = vsub.s32 %v804, %v806
      %v808 = vrot.slane %v794, %v807
      %v809 = vcombine.low %v785, %v801
      %v810 = vcombine.high %v785, %v801
      %v811 = vcombine.low %v792, %v808
      %v812 = vcombine.high %v792, %v808
      %v813 = vpack.c.bf16 %v809, %v741
      %v814 = vpack.c.bf16 %v810, %v742
      %v815 = vpack.c.bf16 %v811, %v743
      %v816 = vpack.c.bf16 %v812, %v744
      %817 = vrot.lane.b32.xlu0 %v515, 96
      %v818 = vpop.permute.xlu0 %817
      %819 = vrot.lane.b32.xlu0 %v518, 96
      %v820 = vpop.permute.xlu0 %819
      %821 = vrot.lane.b32.xlu0 %v524, 96
      %v822 = vpop.permute.xlu0 %821
      %823 = vrot.lane.b32.xlu0 %v526, 96
      %v824 = vpop.permute.xlu0 %823
      %825 = vrot.lane.b32.xlu0 %v530, 96
      %v826 = vpop.permute.xlu0 %825
      %827 = vrot.lane.b32.xlu0 %v532, 96
      %v828 = vpop.permute.xlu0 %827
      %829 = vrot.lane.b32.xlu0 %v536, 96
      %v830 = vpop.permute.xlu0 %829
      %831 = vrot.lane.b32.xlu0 %v538, 96
      %v832 = vpop.permute.xlu0 %831
      %v841 = vcombine.low %v818, %v826
      %v842 = vcombine.high %v818, %v826
      %v844 = vunpack.c.l.s4 1983009808
      %v845 = vunpack.c.0.s8 %v844
      %v846 = vlaneseq
      %v847 = vshrl.u32 %v846, 7
      %v848 = vsub.s32 %v845, %v847
      %v849 = vrot.slane %v841, %v848
      %v851 = vunpack.c.l.s4 1983009808
      %v852 = vunpack.c.0.s8 %v851
      %v853 = vlaneseq
      %v854 = vshrl.u32 %v853, 7
      %v855 = vsub.s32 %v852, %v854
      %v856 = vrot.slane %v842, %v855
      %v857 = vcombine.low %v822, %v830
      %v858 = vcombine.high %v822, %v830
      %v860 = vunpack.c.l.s4 1983009808
      %v861 = vunpack.c.0.s8 %v860
      %v862 = vlaneseq
      %v863 = vshrl.u32 %v862, 7
      %v864 = vsub.s32 %v861, %v863
      %v865 = vrot.slane %v857, %v864
      %v867 = vunpack.c.l.s4 1983009808
      %v868 = vunpack.c.0.s8 %v867
      %v869 = vlaneseq
      %v870 = vshrl.u32 %v869, 7
      %v871 = vsub.s32 %v868, %v870
      %v872 = vrot.slane %v858, %v871
      %v873 = vcombine.low %v849, %v865
      %v874 = vcombine.high %v849, %v865
      %v876 = vunpack.c.l.s4 1934713408
      %v877 = vunpack.c.0.s8 %v876
      %v878 = vlaneseq
      %v879 = vshrl.u32 %v878, 7
      %v880 = vsub.s32 %v877, %v879
      %v881 = vrot.slane %v873, %v880
      %v883 = vunpack.c.l.s4 1934713408
      %v884 = vunpack.c.0.s8 %v883
      %v885 = vlaneseq
      %v886 = vshrl.u32 %v885, 7
      %v887 = vsub.s32 %v884, %v886
      %v888 = vrot.slane %v874, %v887
      %v889 = vcombine.low %v856, %v872
      %v890 = vcombine.high %v856, %v872
      %v892 = vunpack.c.l.s4 1934713408
      %v893 = vunpack.c.0.s8 %v892
      %v894 = vlaneseq
      %v895 = vshrl.u32 %v894, 7
      %v896 = vsub.s32 %v893, %v895
      %v897 = vrot.slane %v889, %v896
      %v899 = vunpack.c.l.s4 1934713408
      %v900 = vunpack.c.0.s8 %v899
      %v901 = vlaneseq
      %v902 = vshrl.u32 %v901, 7
      %v903 = vsub.s32 %v900, %v902
      %v904 = vrot.slane %v890, %v903
      %v905 = vcombine.high %v881, 0.0
      %v906 = vcombine.high %v888, 0.0
      %v907 = vcombine.high %v897, 0.0
      %v908 = vcombine.high %v904, 0.0
      %v909 = vcombine.low %v820, %v828
      %v910 = vcombine.high %v820, %v828
      %v912 = vunpack.c.l.s4 1983009808
      %v913 = vunpack.c.0.s8 %v912
      %v914 = vlaneseq
      %v915 = vshrl.u32 %v914, 7
      %v916 = vsub.s32 %v913, %v915
      %v917 = vrot.slane %v909, %v916
      %v919 = vunpack.c.l.s4 1983009808
      %v920 = vunpack.c.0.s8 %v919
      %v921 = vlaneseq
      %v922 = vshrl.u32 %v921, 7
      %v923 = vsub.s32 %v920, %v922
      %v924 = vrot.slane %v910, %v923
      %v925 = vcombine.low %v824, %v832
      %v926 = vcombine.high %v824, %v832
      %v928 = vunpack.c.l.s4 1983009808
      %v929 = vunpack.c.0.s8 %v928
      %v930 = vlaneseq
      %v931 = vshrl.u32 %v930, 7
      %v932 = vsub.s32 %v929, %v931
      %v933 = vrot.slane %v925, %v932
      %v935 = vunpack.c.l.s4 1983009808
      %v936 = vunpack.c.0.s8 %v935
      %v937 = vlaneseq
      %v938 = vshrl.u32 %v937, 7
      %v939 = vsub.s32 %v936, %v938
      %v940 = vrot.slane %v926, %v939
      %v941 = vcombine.low %v917, %v933
      %v942 = vcombine.high %v917, %v933
      %v944 = vunpack.c.l.s4 1934713408
      %v945 = vunpack.c.0.s8 %v944
      %v946 = vlaneseq
      %v947 = vshrl.u32 %v946, 7
      %v948 = vsub.s32 %v945, %v947
      %v949 = vrot.slane %v941, %v948
      %v951 = vunpack.c.l.s4 1934713408
      %v952 = vunpack.c.0.s8 %v951
      %v953 = vlaneseq
      %v954 = vshrl.u32 %v953, 7
      %v955 = vsub.s32 %v952, %v954
      %v956 = vrot.slane %v942, %v955
      %v957 = vcombine.low %v924, %v940
      %v958 = vcombine.high %v924, %v940
      %v960 = vunpack.c.l.s4 1934713408
      %v961 = vunpack.c.0.s8 %v960
      %v962 = vlaneseq
      %v963 = vshrl.u32 %v962, 7
      %v964 = vsub.s32 %v961, %v963
      %v965 = vrot.slane %v957, %v964
      %v967 = vunpack.c.l.s4 1934713408
      %v968 = vunpack.c.0.s8 %v967
      %v969 = vlaneseq
      %v970 = vshrl.u32 %v969, 7
      %v971 = vsub.s32 %v968, %v970
      %v972 = vrot.slane %v958, %v971
      %v973 = vcombine.high %v949, 0.0
      %v974 = vcombine.high %v956, 0.0
      %v975 = vcombine.high %v965, 0.0
      %v976 = vcombine.high %v972, 0.0
      %v977 = vcombine.low %v881, %v888
      %v979 = vunpack.c.l.s4 1983009808
      %v980 = vunpack.c.0.s8 %v979
      %v981 = vlaneseq
      %v982 = vshrl.u32 %v981, 7
      %v983 = vsub.s32 %v980, %v982
      %v984 = vrot.slane %v977, %v983
      %v985 = vcombine.low %v905, %v906
      %v987 = vunpack.c.l.s4 1983009808
      %v988 = vunpack.c.0.s8 %v987
      %v989 = vlaneseq
      %v990 = vshrl.u32 %v989, 7
      %v991 = vsub.s32 %v988, %v990
      %v992 = vrot.slane %v985, %v991
      %v993 = vcombine.low %v897, %v904
      %v995 = vunpack.c.l.s4 1983009808
      %v996 = vunpack.c.0.s8 %v995
      %v997 = vlaneseq
      %v998 = vshrl.u32 %v997, 7
      %v999 = vsub.s32 %v996, %v998
      %v1000 = vrot.slane %v993, %v999
      %v1001 = vcombine.low %v907, %v908
      %v1003 = vunpack.c.l.s4 1983009808
      %v1004 = vunpack.c.0.s8 %v1003
      %v1005 = vlaneseq
      %v1006 = vshrl.u32 %v1005, 7
      %v1007 = vsub.s32 %v1004, %v1006
      %v1008 = vrot.slane %v1001, %v1007
      %v1009 = vcombine.low %v984, %v992
      %v1010 = vcombine.high %v984, %v992
      %v1012 = vunpack.c.l.s4 1934713408
      %v1013 = vunpack.c.0.s8 %v1012
      %v1014 = vlaneseq
      %v1015 = vshrl.u32 %v1014, 7
      %v1016 = vsub.s32 %v1013, %v1015
      %v1017 = vrot.slane %v1009, %v1016
      %v1019 = vunpack.c.l.s4 1934713408
      %v1020 = vunpack.c.0.s8 %v1019
      %v1021 = vlaneseq
      %v1022 = vshrl.u32 %v1021, 7
      %v1023 = vsub.s32 %v1020, %v1022
      %v1024 = vrot.slane %v1010, %v1023
      %v1025 = vcombine.low %v1000, %v1008
      %v1026 = vcombine.high %v1000, %v1008
      %v1028 = vunpack.c.l.s4 1934713408
      %v1029 = vunpack.c.0.s8 %v1028
      %v1030 = vlaneseq
      %v1031 = vshrl.u32 %v1030, 7
      %v1032 = vsub.s32 %v1029, %v1031
      %v1033 = vrot.slane %v1025, %v1032
      %v1035 = vunpack.c.l.s4 1934713408
      %v1036 = vunpack.c.0.s8 %v1035
      %v1037 = vlaneseq
      %v1038 = vshrl.u32 %v1037, 7
      %v1039 = vsub.s32 %v1036, %v1038
      %v1040 = vrot.slane %v1026, %v1039
      %v1041 = vcombine.low %v1017, %v1033
      %v1042 = vcombine.high %v1017, %v1033
      %v1043 = vcombine.low %v1024, %v1040
      %v1044 = vcombine.high %v1024, %v1040
      %v1045 = vcombine.low %v949, %v956
      %v1047 = vunpack.c.l.s4 1983009808
      %v1048 = vunpack.c.0.s8 %v1047
      %v1049 = vlaneseq
      %v1050 = vshrl.u32 %v1049, 7
      %v1051 = vsub.s32 %v1048, %v1050
      %v1052 = vrot.slane %v1045, %v1051
      %v1053 = vcombine.low %v973, %v974
      %v1055 = vunpack.c.l.s4 1983009808
      %v1056 = vunpack.c.0.s8 %v1055
      %v1057 = vlaneseq
      %v1058 = vshrl.u32 %v1057, 7
      %v1059 = vsub.s32 %v1056, %v1058
      %v1060 = vrot.slane %v1053, %v1059
      %v1061 = vcombine.low %v965, %v972
      %v1063 = vunpack.c.l.s4 1983009808
      %v1064 = vunpack.c.0.s8 %v1063
      %v1065 = vlaneseq
      %v1066 = vshrl.u32 %v1065, 7
      %v1067 = vsub.s32 %v1064, %v1066
      %v1068 = vrot.slane %v1061, %v1067
      %v1069 = vcombine.low %v975, %v976
      %v1071 = vunpack.c.l.s4 1983009808
      %v1072 = vunpack.c.0.s8 %v1071
      %v1073 = vlaneseq
      %v1074 = vshrl.u32 %v1073, 7
      %v1075 = vsub.s32 %v1072, %v1074
      %v1076 = vrot.slane %v1069, %v1075
      %v1077 = vcombine.low %v1052, %v1060
      %v1078 = vcombine.high %v1052, %v1060
      %v1080 = vunpack.c.l.s4 1934713408
      %v1081 = vunpack.c.0.s8 %v1080
      %v1082 = vlaneseq
      %v1083 = vshrl.u32 %v1082, 7
      %v1084 = vsub.s32 %v1081, %v1083
      %v1085 = vrot.slane %v1077, %v1084
      %v1087 = vunpack.c.l.s4 1934713408
      %v1088 = vunpack.c.0.s8 %v1087
      %v1089 = vlaneseq
      %v1090 = vshrl.u32 %v1089, 7
      %v1091 = vsub.s32 %v1088, %v1090
      %v1092 = vrot.slane %v1078, %v1091
      %v1093 = vcombine.low %v1068, %v1076
      %v1094 = vcombine.high %v1068, %v1076
      %v1096 = vunpack.c.l.s4 1934713408
      %v1097 = vunpack.c.0.s8 %v1096
      %v1098 = vlaneseq
      %v1099 = vshrl.u32 %v1098, 7
      %v1100 = vsub.s32 %v1097, %v1099
      %v1101 = vrot.slane %v1093, %v1100
      %v1103 = vunpack.c.l.s4 1934713408
      %v1104 = vunpack.c.0.s8 %v1103
      %v1105 = vlaneseq
      %v1106 = vshrl.u32 %v1105, 7
      %v1107 = vsub.s32 %v1104, %v1106
      %v1108 = vrot.slane %v1094, %v1107
      %v1109 = vcombine.low %v1085, %v1101
      %v1110 = vcombine.high %v1085, %v1101
      %v1111 = vcombine.low %v1092, %v1108
      %v1112 = vcombine.high %v1092, %v1108
      %v1113 = vpack.c.bf16 %v1109, %v1041
      %v1114 = vpack.c.bf16 %v1110, %v1042
      %v1115 = vpack.c.bf16 %v1111, %v1043
      %v1116 = vpack.c.bf16 %v1112, %v1044
      %1117 = vrot.lane.b32.xlu0 %v515, 64
      %v1118 = vpop.permute.xlu0 %1117
      %1119 = vrot.lane.b32.xlu0 %v518, 64
      %v1120 = vpop.permute.xlu0 %1119
      %1121 = vrot.lane.b32.xlu0 %v524, 64
      %v1122 = vpop.permute.xlu0 %1121
      %1123 = vrot.lane.b32.xlu0 %v526, 64
      %v1124 = vpop.permute.xlu0 %1123
      %1125 = vrot.lane.b32.xlu0 %v530, 64
      %v1126 = vpop.permute.xlu0 %1125
      %1127 = vrot.lane.b32.xlu0 %v532, 64
      %v1128 = vpop.permute.xlu0 %1127
      %1129 = vrot.lane.b32.xlu0 %v536, 64
      %v1130 = vpop.permute.xlu0 %1129
      %1131 = vrot.lane.b32.xlu0 %v538, 64
      %v1132 = vpop.permute.xlu0 %1131
      %v1141 = vcombine.low %v1118, %v1126
      %v1142 = vcombine.high %v1118, %v1126
      %v1144 = vunpack.c.l.s4 1983009808
      %v1145 = vunpack.c.0.s8 %v1144
      %v1146 = vlaneseq
      %v1147 = vshrl.u32 %v1146, 7
      %v1148 = vsub.s32 %v1145, %v1147
      %v1149 = vrot.slane %v1141, %v1148
      %v1151 = vunpack.c.l.s4 1983009808
      %v1152 = vunpack.c.0.s8 %v1151
      %v1153 = vlaneseq
      %v1154 = vshrl.u32 %v1153, 7
      %v1155 = vsub.s32 %v1152, %v1154
      %v1156 = vrot.slane %v1142, %v1155
      %v1157 = vcombine.low %v1122, %v1130
      %v1158 = vcombine.high %v1122, %v1130
      %v1160 = vunpack.c.l.s4 1983009808
      %v1161 = vunpack.c.0.s8 %v1160
      %v1162 = vlaneseq
      %v1163 = vshrl.u32 %v1162, 7
      %v1164 = vsub.s32 %v1161, %v1163
      %v1165 = vrot.slane %v1157, %v1164
      %v1167 = vunpack.c.l.s4 1983009808
      %v1168 = vunpack.c.0.s8 %v1167
      %v1169 = vlaneseq
      %v1170 = vshrl.u32 %v1169, 7
      %v1171 = vsub.s32 %v1168, %v1170
      %v1172 = vrot.slane %v1158, %v1171
      %v1173 = vcombine.low %v1149, %v1165
      %v1174 = vcombine.high %v1149, %v1165
      %v1176 = vunpack.c.l.s4 1934713408
      %v1177 = vunpack.c.0.s8 %v1176
      %v1178 = vlaneseq
      %v1179 = vshrl.u32 %v1178, 7
      %v1180 = vsub.s32 %v1177, %v1179
      %v1181 = vrot.slane %v1173, %v1180
      %v1183 = vunpack.c.l.s4 1934713408
      %v1184 = vunpack.c.0.s8 %v1183
      %v1185 = vlaneseq
      %v1186 = vshrl.u32 %v1185, 7
      %v1187 = vsub.s32 %v1184, %v1186
      %v1188 = vrot.slane %v1174, %v1187
      %v1189 = vcombine.low %v1156, %v1172
      %v1190 = vcombine.high %v1156, %v1172
      %v1192 = vunpack.c.l.s4 1934713408
      %v1193 = vunpack.c.0.s8 %v1192
      %v1194 = vlaneseq
      %v1195 = vshrl.u32 %v1194, 7
      %v1196 = vsub.s32 %v1193, %v1195
      %v1197 = vrot.slane %v1189, %v1196
      %v1199 = vunpack.c.l.s4 1934713408
      %v1200 = vunpack.c.0.s8 %v1199
      %v1201 = vlaneseq
      %v1202 = vshrl.u32 %v1201, 7
      %v1203 = vsub.s32 %v1200, %v1202
      %v1204 = vrot.slane %v1190, %v1203
      %v1205 = vcombine.high %v1181, 0.0
      %v1206 = vcombine.high %v1188, 0.0
      %v1207 = vcombine.high %v1197, 0.0
      %v1208 = vcombine.high %v1204, 0.0
      %v1209 = vcombine.low %v1120, %v1128
      %v1210 = vcombine.high %v1120, %v1128
      %v1212 = vunpack.c.l.s4 1983009808
      %v1213 = vunpack.c.0.s8 %v1212
      %v1214 = vlaneseq
      %v1215 = vshrl.u32 %v1214, 7
      %v1216 = vsub.s32 %v1213, %v1215
      %v1217 = vrot.slane %v1209, %v1216
      %v1219 = vunpack.c.l.s4 1983009808
      %v1220 = vunpack.c.0.s8 %v1219
      %v1221 = vlaneseq
      %v1222 = vshrl.u32 %v1221, 7
      %v1223 = vsub.s32 %v1220, %v1222
      %v1224 = vrot.slane %v1210, %v1223
      %v1225 = vcombine.low %v1124, %v1132
      %v1226 = vcombine.high %v1124, %v1132
      %v1228 = vunpack.c.l.s4 1983009808
      %v1229 = vunpack.c.0.s8 %v1228
      %v1230 = vlaneseq
      %v1231 = vshrl.u32 %v1230, 7
      %v1232 = vsub.s32 %v1229, %v1231
      %v1233 = vrot.slane %v1225, %v1232
      %v1235 = vunpack.c.l.s4 1983009808
      %v1236 = vunpack.c.0.s8 %v1235
      %v1237 = vlaneseq
      %v1238 = vshrl.u32 %v1237, 7
      %v1239 = vsub.s32 %v1236, %v1238
      %v1240 = vrot.slane %v1226, %v1239
      %v1241 = vcombine.low %v1217, %v1233
      %v1242 = vcombine.high %v1217, %v1233
      %v1244 = vunpack.c.l.s4 1934713408
      %v1245 = vunpack.c.0.s8 %v1244
      %v1246 = vlaneseq
      %v1247 = vshrl.u32 %v1246, 7
      %v1248 = vsub.s32 %v1245, %v1247
      %v1249 = vrot.slane %v1241, %v1248
      %v1251 = vunpack.c.l.s4 1934713408
      %v1252 = vunpack.c.0.s8 %v1251
      %v1253 = vlaneseq
      %v1254 = vshrl.u32 %v1253, 7
      %v1255 = vsub.s32 %v1252, %v1254
      %v1256 = vrot.slane %v1242, %v1255
      %v1257 = vcombine.low %v1224, %v1240
      %v1258 = vcombine.high %v1224, %v1240
      %v1260 = vunpack.c.l.s4 1934713408
      %v1261 = vunpack.c.0.s8 %v1260
      %v1262 = vlaneseq
      %v1263 = vshrl.u32 %v1262, 7
      %v1264 = vsub.s32 %v1261, %v1263
      %v1265 = vrot.slane %v1257, %v1264
      %v1267 = vunpack.c.l.s4 1934713408
      %v1268 = vunpack.c.0.s8 %v1267
      %v1269 = vlaneseq
      %v1270 = vshrl.u32 %v1269, 7
      %v1271 = vsub.s32 %v1268, %v1270
      %v1272 = vrot.slane %v1258, %v1271
      %v1273 = vcombine.high %v1249, 0.0
      %v1274 = vcombine.high %v1256, 0.0
      %v1275 = vcombine.high %v1265, 0.0
      %v1276 = vcombine.high %v1272, 0.0
      %v1277 = vcombine.low %v1181, %v1188
      %v1279 = vunpack.c.l.s4 1983009808
      %v1280 = vunpack.c.0.s8 %v1279
      %v1281 = vlaneseq
      %v1282 = vshrl.u32 %v1281, 7
      %v1283 = vsub.s32 %v1280, %v1282
      %v1284 = vrot.slane %v1277, %v1283
      %v1285 = vcombine.low %v1205, %v1206
      %v1287 = vunpack.c.l.s4 1983009808
      %v1288 = vunpack.c.0.s8 %v1287
      %v1289 = vlaneseq
      %v1290 = vshrl.u32 %v1289, 7
      %v1291 = vsub.s32 %v1288, %v1290
      %v1292 = vrot.slane %v1285, %v1291
      %v1293 = vcombine.low %v1197, %v1204
      %v1295 = vunpack.c.l.s4 1983009808
      %v1296 = vunpack.c.0.s8 %v1295
      %v1297 = vlaneseq
      %v1298 = vshrl.u32 %v1297, 7
      %v1299 = vsub.s32 %v1296, %v1298
      %v1300 = vrot.slane %v1293, %v1299
      %v1301 = vcombine.low %v1207, %v1208
      %v1303 = vunpack.c.l.s4 1983009808
      %v1304 = vunpack.c.0.s8 %v1303
      %v1305 = vlaneseq
      %v1306 = vshrl.u32 %v1305, 7
      %v1307 = vsub.s32 %v1304, %v1306
      %v1308 = vrot.slane %v1301, %v1307
      %v1309 = vcombine.low %v1284, %v1292
      %v1310 = vcombine.high %v1284, %v1292
      %v1312 = vunpack.c.l.s4 1934713408
      %v1313 = vunpack.c.0.s8 %v1312
      %v1314 = vlaneseq
      %v1315 = vshrl.u32 %v1314, 7
      %v1316 = vsub.s32 %v1313, %v1315
      %v1317 = vrot.slane %v1309, %v1316
      %v1319 = vunpack.c.l.s4 1934713408
      %v1320 = vunpack.c.0.s8 %v1319
      %v1321 = vlaneseq
      %v1322 = vshrl.u32 %v1321, 7
      %v1323 = vsub.s32 %v1320, %v1322
      %v1324 = vrot.slane %v1310, %v1323
      %v1325 = vcombine.low %v1300, %v1308
      %v1326 = vcombine.high %v1300, %v1308
      %v1328 = vunpack.c.l.s4 1934713408
      %v1329 = vunpack.c.0.s8 %v1328
      %v1330 = vlaneseq
      %v1331 = vshrl.u32 %v1330, 7
      %v1332 = vsub.s32 %v1329, %v1331
      %v1333 = vrot.slane %v1325, %v1332
      %v1335 = vunpack.c.l.s4 1934713408
      %v1336 = vunpack.c.0.s8 %v1335
      %v1337 = vlaneseq
      %v1338 = vshrl.u32 %v1337, 7
      %v1339 = vsub.s32 %v1336, %v1338
      %v1340 = vrot.slane %v1326, %v1339
      %v1341 = vcombine.low %v1317, %v1333
      %v1342 = vcombine.high %v1317, %v1333
      %v1343 = vcombine.low %v1324, %v1340
      %v1344 = vcombine.high %v1324, %v1340
      %v1345 = vcombine.low %v1249, %v1256
      %v1347 = vunpack.c.l.s4 1983009808
      %v1348 = vunpack.c.0.s8 %v1347
      %v1349 = vlaneseq
      %v1350 = vshrl.u32 %v1349, 7
      %v1351 = vsub.s32 %v1348, %v1350
      %v1352 = vrot.slane %v1345, %v1351
      %v1353 = vcombine.low %v1273, %v1274
      %v1355 = vunpack.c.l.s4 1983009808
      %v1356 = vunpack.c.0.s8 %v1355
      %v1357 = vlaneseq
      %v1358 = vshrl.u32 %v1357, 7
      %v1359 = vsub.s32 %v1356, %v1358
      %v1360 = vrot.slane %v1353, %v1359
      %v1361 = vcombine.low %v1265, %v1272
      %v1363 = vunpack.c.l.s4 1983009808
      %v1364 = vunpack.c.0.s8 %v1363
      %v1365 = vlaneseq
      %v1366 = vshrl.u32 %v1365, 7
      %v1367 = vsub.s32 %v1364, %v1366
      %v1368 = vrot.slane %v1361, %v1367
      %v1369 = vcombine.low %v1275, %v1276
      %v1371 = vunpack.c.l.s4 1983009808
      %v1372 = vunpack.c.0.s8 %v1371
      %v1373 = vlaneseq
      %v1374 = vshrl.u32 %v1373, 7
      %v1375 = vsub.s32 %v1372, %v1374
      %v1376 = vrot.slane %v1369, %v1375
      %v1377 = vcombine.low %v1352, %v1360
      %v1378 = vcombine.high %v1352, %v1360
      %v1380 = vunpack.c.l.s4 1934713408
      %v1381 = vunpack.c.0.s8 %v1380
      %v1382 = vlaneseq
      %v1383 = vshrl.u32 %v1382, 7
      %v1384 = vsub.s32 %v1381, %v1383
      %v1385 = vrot.slane %v1377, %v1384
      %v1387 = vunpack.c.l.s4 1934713408
      %v1388 = vunpack.c.0.s8 %v1387
      %v1389 = vlaneseq
      %v1390 = vshrl.u32 %v1389, 7
      %v1391 = vsub.s32 %v1388, %v1390
      %v1392 = vrot.slane %v1378, %v1391
      %v1393 = vcombine.low %v1368, %v1376
      %v1394 = vcombine.high %v1368, %v1376
      %v1396 = vunpack.c.l.s4 1934713408
      %v1397 = vunpack.c.0.s8 %v1396
      %v1398 = vlaneseq
      %v1399 = vshrl.u32 %v1398, 7
      %v1400 = vsub.s32 %v1397, %v1399
      %v1401 = vrot.slane %v1393, %v1400
      %v1403 = vunpack.c.l.s4 1934713408
      %v1404 = vunpack.c.0.s8 %v1403
      %v1405 = vlaneseq
      %v1406 = vshrl.u32 %v1405, 7
      %v1407 = vsub.s32 %v1404, %v1406
      %v1408 = vrot.slane %v1394, %v1407
      %v1409 = vcombine.low %v1385, %v1401
      %v1410 = vcombine.high %v1385, %v1401
      %v1411 = vcombine.low %v1392, %v1408
      %v1412 = vcombine.high %v1392, %v1408
      %v1413 = vpack.c.bf16 %v1409, %v1341
      %v1414 = vpack.c.bf16 %v1410, %v1342
      %v1415 = vpack.c.bf16 %v1411, %v1343
      %v1416 = vpack.c.bf16 %v1412, %v1344
      %vm1417 = vcmask 64512
      %v1419 = vsel %vm1417, %v813, 0
      %v1422 = vsel %vm1417, %v1113, 0
      %1424 = vmatprep.subr.bf16.mxu0 0
      %1425 = vmatpush1.bf16.xpose.msra.mxu0 %v1422
      %1426 = vmatprep.subr.bf16.mxu0 0
      %1427 = vmatpush1.bf16.xpose.msra.mxu0 0
      %1428 = vmatprep.subr.bf16.mxu0 0
      %1429 = vmatpush1.bf16.xpose.msra.mxu0 0
      %1430 = vmatprep.subr.bf16.mxu0 0
      %1431 = vmatpush1.bf16.xpose.msra.mxu0 0
      %1432 = vmatprep.subr.bf16.mxu0 0
      %1433 = vmatpush1.bf16.xpose.msra.mxu0 0
      %1434 = vmatprep.subr.bf16.mxu0 0
      %1435 = vmatpush1.bf16.xpose.msra.mxu0 0
      %1436 = vmatprep.subr.bf16.mxu0 0
      %1437 = vmatpush1.bf16.xpose.msra.mxu0 0
      %1438 = vmatprep.subr.bf16.mxu0 0
      %1439 = vmatpush1.bf16.xpose.msra.mxu0 0
      %1440 = vmatprep.subr.bf16.mxu0 0
      %1441 = vmatpush1.bf16.xpose.msra.mxu0 0
      %1442 = vmatprep.subr.bf16.mxu0 0
      %1443 = vmatpush1.bf16.xpose.msra.mxu0 0
      %1444 = vmatprep.subr.bf16.mxu0 0
      %1445 = vmatpush1.bf16.xpose.msra.mxu0 0
      %1446 = vmatprep.subr.bf16.mxu0 0
      %1447 = vmatpush1.bf16.xpose.msra.mxu0 0
      %1448 = vmatprep.subr.bf16.mxu0 0
      %1449 = vmatpush1.bf16.xpose.msra.mxu0 0
      %1450 = vmatprep.subr.bf16.mxu0 0
      %1451 = vmatpush1.bf16.xpose.msra.mxu0 0
      %1452 = vmatprep.subr.bf16.mxu0 0
      %1453 = vmatpush1.bf16.xpose.msra.mxu0 0
      %1454 = vmatprep.subr.bf16.mxu0 0
      %1455 = vmatpush1.bf16.xpose.msra.mxu0 0
      %1456 = vmatprep.mubr.bf16.mxu0 0
      %1457 = vmatmul.mubr.bf16.gmra.mrb[0].mxu0 %v1419
      %v1458 = vpop.f32.mrb[0].mxu0
      %v1459 = vadd.f32 0.0, %v1458
      %v1460 = vpop.f32.mrb[0].mxu0
      %v1461 = vpop.f32.mrb[0].mxu0
      %v1462 = vadd.f32 0.0, %v1461
      %v1463 = vpop.f32.mrb[0].mxu0
      %1464 = vdwg.mxu0
      %v1466 = vsel %vm1417, %v814, 0
      %v1469 = vsel %vm1417, %v1114, 0
      %1471 = vmatprep.subr.bf16.mxu0 0
      %1472 = vmatpush1.bf16.xpose.msra.mxu0 %v1469
      %1473 = vmatprep.subr.bf16.mxu0 0
      %1474 = vmatpush1.bf16.xpose.msra.mxu0 0
      %1475 = vmatprep.subr.bf16.mxu0 0
      %1476 = vmatpush1.bf16.xpose.msra.mxu0 0
      %1477 = vmatprep.subr.bf16.mxu0 0
      %1478 = vmatpush1.bf16.xpose.msra.mxu0 0
      %1479 = vmatprep.subr.bf16.mxu0 0
      %1480 = vmatpush1.bf16.xpose.msra.mxu0 0
      %1481 = vmatprep.subr.bf16.mxu0 0
      %1482 = vmatpush1.bf16.xpose.msra.mxu0 0
      %1483 = vmatprep.subr.bf16.mxu0 0
      %1484 = vmatpush1.bf16.xpose.msra.mxu0 0
      %1485 = vmatprep.subr.bf16.mxu0 0
      %1486 = vmatpush1.bf16.xpose.msra.mxu0 0
      %1487 = vmatprep.subr.bf16.mxu0 0
      %1488 = vmatpush1.bf16.xpose.msra.mxu0 0
      %1489 = vmatprep.subr.bf16.mxu0 0
      %1490 = vmatpush1.bf16.xpose.msra.mxu0 0
      %1491 = vmatprep.subr.bf16.mxu0 0
      %1492 = vmatpush1.bf16.xpose.msra.mxu0 0
      %1493 = vmatprep.subr.bf16.mxu0 0
      %1494 = vmatpush1.bf16.xpose.msra.mxu0 0
      %1495 = vmatprep.subr.bf16.mxu0 0
      %1496 = vmatpush1.bf16.xpose.msra.mxu0 0
      %1497 = vmatprep.subr.bf16.mxu0 0
      %1498 = vmatpush1.bf16.xpose.msra.mxu0 0
      %1499 = vmatprep.subr.bf16.mxu0 0
      %1500 = vmatpush1.bf16.xpose.msra.mxu0 0
      %1501 = vmatprep.subr.bf16.mxu0 0
      %1502 = vmatpush1.bf16.xpose.msra.mxu0 0
      %1503 = vmatprep.mubr.bf16.mxu0 0
      %1504 = vmatmul.mubr.bf16.gmra.mrb[0].mxu0 %v1466
      %v1505 = vpop.f32.mrb[0].mxu0
      %v1506 = vadd.f32 0.0, %v1505
      %v1507 = vpop.f32.mrb[0].mxu0
      %v1508 = vpop.f32.mrb[0].mxu0
      %v1509 = vadd.f32 0.0, %v1508
      %v1510 = vpop.f32.mrb[0].mxu0
      %1511 = vdwg.mxu0
      %v1513 = vsel %vm1417, %v815, 0
      %v1516 = vsel %vm1417, %v1115, 0
      %1518 = vmatprep.subr.bf16.mxu0 0
      %1519 = vmatpush1.bf16.xpose.msra.mxu0 %v1516
      %1520 = vmatprep.subr.bf16.mxu0 0
      %1521 = vmatpush1.bf16.xpose.msra.mxu0 0
      %1522 = vmatprep.subr.bf16.mxu0 0
      %1523 = vmatpush1.bf16.xpose.msra.mxu0 0
      %1524 = vmatprep.subr.bf16.mxu0 0
      %1525 = vmatpush1.bf16.xpose.msra.mxu0 0
      %1526 = vmatprep.subr.bf16.mxu0 0
      %1527 = vmatpush1.bf16.xpose.msra.mxu0 0
      %1528 = vmatprep.subr.bf16.mxu0 0
      %1529 = vmatpush1.bf16.xpose.msra.mxu0 0
      %1530 = vmatprep.subr.bf16.mxu0 0
      %1531 = vmatpush1.bf16.xpose.msra.mxu0 0
      %1532 = vmatprep.subr.bf16.mxu0 0
      %1533 = vmatpush1.bf16.xpose.msra.mxu0 0
      %1534 = vmatprep.subr.bf16.mxu0 0
      %1535 = vmatpush1.bf16.xpose.msra.mxu0 0
      %1536 = vmatprep.subr.bf16.mxu0 0
      %1537 = vmatpush1.bf16.xpose.msra.mxu0 0
      %1538 = vmatprep.subr.bf16.mxu0 0
      %1539 = vmatpush1.bf16.xpose.msra.mxu0 0
      %1540 = vmatprep.subr.bf16.mxu0 0
      %1541 = vmatpush1.bf16.xpose.msra.mxu0 0
      %1542 = vmatprep.subr.bf16.mxu0 0
      %1543 = vmatpush1.bf16.xpose.msra.mxu0 0
      %1544 = vmatprep.subr.bf16.mxu0 0
      %1545 = vmatpush1.bf16.xpose.msra.mxu0 0
      %1546 = vmatprep.subr.bf16.mxu0 0
      %1547 = vmatpush1.bf16.xpose.msra.mxu0 0
      %1548 = vmatprep.subr.bf16.mxu0 0
      %1549 = vmatpush1.bf16.xpose.msra.mxu0 0
      %1550 = vmatprep.mubr.bf16.mxu0 0
      %1551 = vmatmul.mubr.bf16.gmra.mrb[0].mxu0 %v1513
      %v1552 = vpop.f32.mrb[0].mxu0
      %v1553 = vadd.f32 0.0, %v1552
      %v1554 = vpop.f32.mrb[0].mxu0
      %v1555 = vpop.f32.mrb[0].mxu0
      %v1556 = vadd.f32 0.0, %v1555
      %v1557 = vpop.f32.mrb[0].mxu0
      %1558 = vdwg.mxu0
      %v1560 = vsel %vm1417, %v816, 0
      %v1563 = vsel %vm1417, %v1116, 0
      %1565 = vmatprep.subr.bf16.mxu0 0
      %1566 = vmatpush1.bf16.xpose.msra.mxu0 %v1563
      %1567 = vmatprep.subr.bf16.mxu0 0
      %1568 = vmatpush1.bf16.xpose.msra.mxu0 0
      %1569 = vmatprep.subr.bf16.mxu0 0
      %1570 = vmatpush1.bf16.xpose.msra.mxu0 0
      %1571 = vmatprep.subr.bf16.mxu0 0
      %1572 = vmatpush1.bf16.xpose.msra.mxu0 0
      %1573 = vmatprep.subr.bf16.mxu0 0
      %1574 = vmatpush1.bf16.xpose.msra.mxu0 0
      %1575 = vmatprep.subr.bf16.mxu0 0
      %1576 = vmatpush1.bf16.xpose.msra.mxu0 0
      %1577 = vmatprep.subr.bf16.mxu0 0
      %1578 = vmatpush1.bf16.xpose.msra.mxu0 0
      %1579 = vmatprep.subr.bf16.mxu0 0
      %1580 = vmatpush1.bf16.xpose.msra.mxu0 0
      %1581 = vmatprep.subr.bf16.mxu0 0
      %1582 = vmatpush1.bf16.xpose.msra.mxu0 0
      %1583 = vmatprep.subr.bf16.mxu0 0
      %1584 = vmatpush1.bf16.xpose.msra.mxu0 0
      %1585 = vmatprep.subr.bf16.mxu0 0
      %1586 = vmatpush1.bf16.xpose.msra.mxu0 0
      %1587 = vmatprep.subr.bf16.mxu0 0
      %1588 = vmatpush1.bf16.xpose.msra.mxu0 0
      %1589 = vmatprep.subr.bf16.mxu0 0
      %1590 = vmatpush1.bf16.xpose.msra.mxu0 0
      %1591 = vmatprep.subr.bf16.mxu0 0
      %1592 = vmatpush1.bf16.xpose.msra.mxu0 0
      %1593 = vmatprep.subr.bf16.mxu0 0
      %1594 = vmatpush1.bf16.xpose.msra.mxu0 0
      %1595 = vmatprep.subr.bf16.mxu0 0
      %1596 = vmatpush1.bf16.xpose.msra.mxu0 0
      %1597 = vmatprep.mubr.bf16.mxu0 0
      %1598 = vmatmul.mubr.bf16.gmra.mrb[0].mxu0 %v1560
      %v1599 = vpop.f32.mrb[0].mxu0
      %v1600 = vadd.f32 0.0, %v1599
      %v1601 = vpop.f32.mrb[0].mxu0
      %v1602 = vpop.f32.mrb[0].mxu0
      %v1603 = vadd.f32 0.0, %v1602
      %v1604 = vpop.f32.mrb[0].mxu0
      %1605 = vdwg.mxu0
      %s1606 = sld [smem:[#allocation3]]
      %v1607 = vlaneseq
      %v1608 = vand.u32 %v1607, 127
      %v1609 = vstv %s1606
      %vm1610 = vcmp.lt.s32.totalorder %v1608, %v1609
      %v1611 = vsel %vm1610, 1, 0
      %vm1612 = vcmp.eq.s32.totalorder %v1611, 1
      %v1613 = vsel %vm1612, %v1459, -1e+30
      %v1614 = vsel %vm1612, %v1462, -1e+30
      %v1615 = vsel %vm1612, %v1506, -1e+30
      %v1616 = vsel %vm1612, %v1509, -1e+30
      %v1617 = vsel %vm1612, %v1553, -1e+30
      %v1618 = vsel %vm1612, %v1556, -1e+30
      %v1619 = vsel %vm1612, %v1600, -1e+30
      %v1620 = vsel %vm1612, %v1603, -1e+30
      %vm1621 = vcmask 130048
      %v1622 = vsel %vm1621, %v1613, -inf
      %1623 = vmax.xlane.f32.xlu0 %v1622
      %v1624 = vpop.xlane.xlu0 %1623
      %v1625 = vsel %vm1621, %v1614, -inf
      %1626 = vmax.xlane.f32.xlu0 %v1625
      %v1627 = vpop.xlane.xlu0 %1626
      %v1628 = vsel %vm1621, %v1615, -inf
      %1629 = vmax.xlane.f32.xlu0 %v1628
      %v1630 = vpop.xlane.xlu0 %1629
      %v1631 = vsel %vm1621, %v1616, -inf
      %1632 = vmax.xlane.f32.xlu0 %v1631
      %v1633 = vpop.xlane.xlu0 %1632
      %v1634 = vsel %vm1621, %v1617, -inf
      %1635 = vmax.xlane.f32.xlu0 %v1634
      %v1636 = vpop.xlane.xlu0 %1635
      %v1637 = vsel %vm1621, %v1618, -inf
      %1638 = vmax.xlane.f32.xlu0 %v1637
      %v1639 = vpop.xlane.xlu0 %1638
      %v1640 = vsel %vm1621, %v1619, -inf
      %1641 = vmax.xlane.f32.xlu0 %v1640
      %v1642 = vpop.xlane.xlu0 %1641
      %v1643 = vsel %vm1621, %v1620, -inf
      %1644 = vmax.xlane.f32.xlu0 %v1643
      %v1645 = vpop.xlane.xlu0 %1644
      %v1646 = vsub.f32 %v1613, %v1624
      %v1647 = vsub.f32 %v1614, %v1627
      %v1648 = vsub.f32 %v1615, %v1630
      %v1649 = vsub.f32 %v1616, %v1633
      %v1650 = vsub.f32 %v1617, %v1636
      %v1651 = vsub.f32 %v1618, %v1639
      %v1652 = vsub.f32 %v1619, %v1642
      %v1653 = vsub.f32 %v1620, %v1645
      %v1654 = vmul.f32 %v1646, 1.442695
      %v1655 = vpow.pop %v1654
      %v1656 = vmul.f32 %v1647, 1.442695
      %v1657 = vpow.pop %v1656
      %v1658 = vmul.f32 %v1648, 1.442695
      %v1659 = vpow.pop %v1658
      %v1660 = vmul.f32 %v1649, 1.442695
      %v1661 = vpow.pop %v1660
      %v1662 = vmul.f32 %v1650, 1.442695
      %v1663 = vpow.pop %v1662
      %v1664 = vmul.f32 %v1651, 1.442695
      %v1665 = vpow.pop %v1664
      %v1666 = vmul.f32 %v1652, 1.442695
      %v1667 = vpow.pop %v1666
      %v1668 = vmul.f32 %v1653, 1.442695
      %v1669 = vpow.pop %v1668
      %v1670 = vsel %vm1621, %v1655, 0.0
      %1671 = vadd.xlane.f32.xlu0 %v1670
      %v1672 = vpop.xlane.xlu0 %1671
      %v1673 = vsel %vm1621, %v1657, 0.0
      %1674 = vadd.xlane.f32.xlu0 %v1673
      %v1675 = vpop.xlane.xlu0 %1674
      %v1676 = vsel %vm1621, %v1659, 0.0
      %1677 = vadd.xlane.f32.xlu0 %v1676
      %v1678 = vpop.xlane.xlu0 %1677
      %v1679 = vsel %vm1621, %v1661, 0.0
      %1680 = vadd.xlane.f32.xlu0 %v1679
      %v1681 = vpop.xlane.xlu0 %1680
      %v1682 = vsel %vm1621, %v1663, 0.0
      %1683 = vadd.xlane.f32.xlu0 %v1682
      %v1684 = vpop.xlane.xlu0 %1683
      %v1685 = vsel %vm1621, %v1665, 0.0
      %1686 = vadd.xlane.f32.xlu0 %v1685
      %v1687 = vpop.xlane.xlu0 %1686
      %v1688 = vsel %vm1621, %v1667, 0.0
      %1689 = vadd.xlane.f32.xlu0 %v1688
      %v1690 = vpop.xlane.xlu0 %1689
      %v1691 = vsel %vm1621, %v1669, 0.0
      %1692 = vadd.xlane.f32.xlu0 %v1691
      %v1693 = vpop.xlane.xlu0 %1692
      %v1694 = vrcp.pop %v1672
      %v1695 = vrcp.pop %v1675
      %v1696 = vrcp.pop %v1678
      %v1697 = vrcp.pop %v1681
      %v1698 = vrcp.pop %v1684
      %v1699 = vrcp.pop %v1687
      %v1700 = vrcp.pop %v1690
      %v1701 = vrcp.pop %v1693
      %v1702 = vmul.f32 %v1655, %v1694
      %v1703 = vmul.f32 %v1657, %v1695
      %v1704 = vmul.f32 %v1659, %v1696
      %v1705 = vmul.f32 %v1661, %v1697
      %v1706 = vmul.f32 %v1663, %v1698
      %v1707 = vmul.f32 %v1665, %v1699
      %v1708 = vmul.f32 %v1667, %v1700
      %v1709 = vmul.f32 %v1669, %v1701
      %v1710 = vpack.c.bf16 %v1703, %v1702
      %v1711 = vpack.c.bf16 %v1705, %v1704
      %v1712 = vpack.c.bf16 %v1707, %v1706
      %v1713 = vpack.c.bf16 %v1709, %v1708
      %v1715 = vsel %vm1621, %v1710, 0
      %1717 = vmatprep.subr.bf16.mxu0 0
      %1718 = vmatpush1.bf16.msra.mxu0 %v1413
      %1719 = vmatprep.subr.bf16.mxu0 0
      %1720 = vmatpush1.bf16.msra.mxu0 0
      %1721 = vmatprep.subr.bf16.mxu0 0
      %1722 = vmatpush1.bf16.msra.mxu0 0
      %1723 = vmatprep.subr.bf16.mxu0 0
      %1724 = vmatpush1.bf16.msra.mxu0 0
      %1725 = vmatprep.subr.bf16.mxu0 0
      %1726 = vmatpush1.bf16.msra.mxu0 0
      %1727 = vmatprep.subr.bf16.mxu0 0
      %1728 = vmatpush1.bf16.msra.mxu0 0
      %1729 = vmatprep.subr.bf16.mxu0 0
      %1730 = vmatpush1.bf16.msra.mxu0 0
      %1731 = vmatprep.subr.bf16.mxu0 0
      %1732 = vmatpush1.bf16.msra.mxu0 0
      %1733 = vmatprep.subr.bf16.mxu0 0
      %1734 = vmatpush1.bf16.msra.mxu0 0
      %1735 = vmatprep.subr.bf16.mxu0 0
      %1736 = vmatpush1.bf16.msra.mxu0 0
      %1737 = vmatprep.subr.bf16.mxu0 0
      %1738 = vmatpush1.bf16.msra.mxu0 0
      %1739 = vmatprep.subr.bf16.mxu0 0
      %1740 = vmatpush1.bf16.msra.mxu0 0
      %1741 = vmatprep.subr.bf16.mxu0 0
      %1742 = vmatpush1.bf16.msra.mxu0 0
      %1743 = vmatprep.subr.bf16.mxu0 0
      %1744 = vmatpush1.bf16.msra.mxu0 0
      %1745 = vmatprep.subr.bf16.mxu0 0
      %1746 = vmatpush1.bf16.msra.mxu0 0
      %1747 = vmatprep.subr.bf16.mxu0 0
      %1748 = vmatpush1.bf16.msra.mxu0 0
      %1749 = vmatprep.mubr.bf16.mxu0 0
      %1750 = vmatmul.mubr.bf16.gmra.mrb[0].mxu0 %v1715
      %v1751 = vpop.f32.mrb[0].mxu0
      %v1752 = vadd.f32 0.0, %v1751
      %v1753 = vpop.f32.mrb[0].mxu0
      %v1754 = vpop.f32.mrb[0].mxu0
      %v1755 = vadd.f32 0.0, %v1754
      %v1756 = vpop.f32.mrb[0].mxu0
      %1757 = vdwg.mxu0
      %v1759 = vsel %vm1621, %v1711, 0
      %1761 = vmatprep.subr.bf16.mxu0 0
      %1762 = vmatpush1.bf16.msra.mxu0 %v1414
      %1763 = vmatprep.subr.bf16.mxu0 0
      %1764 = vmatpush1.bf16.msra.mxu0 0
      %1765 = vmatprep.subr.bf16.mxu0 0
      %1766 = vmatpush1.bf16.msra.mxu0 0
      %1767 = vmatprep.subr.bf16.mxu0 0
      %1768 = vmatpush1.bf16.msra.mxu0 0
      %1769 = vmatprep.subr.bf16.mxu0 0
      %1770 = vmatpush1.bf16.msra.mxu0 0
      %1771 = vmatprep.subr.bf16.mxu0 0
      %1772 = vmatpush1.bf16.msra.mxu0 0
      %1773 = vmatprep.subr.bf16.mxu0 0
      %1774 = vmatpush1.bf16.msra.mxu0 0
      %1775 = vmatprep.subr.bf16.mxu0 0
      %1776 = vmatpush1.bf16.msra.mxu0 0
      %1777 = vmatprep.subr.bf16.mxu0 0
      %1778 = vmatpush1.bf16.msra.mxu0 0
      %1779 = vmatprep.subr.bf16.mxu0 0
      %1780 = vmatpush1.bf16.msra.mxu0 0
      %1781 = vmatprep.subr.bf16.mxu0 0
      %1782 = vmatpush1.bf16.msra.mxu0 0
      %1783 = vmatprep.subr.bf16.mxu0 0
      %1784 = vmatpush1.bf16.msra.mxu0 0
      %1785 = vmatprep.subr.bf16.mxu0 0
      %1786 = vmatpush1.bf16.msra.mxu0 0
      %1787 = vmatprep.subr.bf16.mxu0 0
      %1788 = vmatpush1.bf16.msra.mxu0 0
      %1789 = vmatprep.subr.bf16.mxu0 0
      %1790 = vmatpush1.bf16.msra.mxu0 0
      %1791 = vmatprep.subr.bf16.mxu0 0
      %1792 = vmatpush1.bf16.msra.mxu0 0
      %1793 = vmatprep.mubr.bf16.mxu0 0
      %1794 = vmatmul.mubr.bf16.gmra.mrb[0].mxu0 %v1759
      %v1795 = vpop.f32.mrb[0].mxu0
      %v1796 = vadd.f32 0.0, %v1795
      %v1797 = vpop.f32.mrb[0].mxu0
      %v1798 = vpop.f32.mrb[0].mxu0
      %v1799 = vadd.f32 0.0, %v1798
      %v1800 = vpop.f32.mrb[0].mxu0
      %1801 = vdwg.mxu0
      %v1803 = vsel %vm1621, %v1712, 0
      %1805 = vmatprep.subr.bf16.mxu0 0
      %1806 = vmatpush1.bf16.msra.mxu0 %v1415
      %1807 = vmatprep.subr.bf16.mxu0 0
      %1808 = vmatpush1.bf16.msra.mxu0 0
      %1809 = vmatprep.subr.bf16.mxu0 0
      %1810 = vmatpush1.bf16.msra.mxu0 0
      %1811 = vmatprep.subr.bf16.mxu0 0
      %1812 = vmatpush1.bf16.msra.mxu0 0
      %1813 = vmatprep.subr.bf16.mxu0 0
      %1814 = vmatpush1.bf16.msra.mxu0 0
      %1815 = vmatprep.subr.bf16.mxu0 0
      %1816 = vmatpush1.bf16.msra.mxu0 0
      %1817 = vmatprep.subr.bf16.mxu0 0
      %1818 = vmatpush1.bf16.msra.mxu0 0
      %1819 = vmatprep.subr.bf16.mxu0 0
      %1820 = vmatpush1.bf16.msra.mxu0 0
      %1821 = vmatprep.subr.bf16.mxu0 0
      %1822 = vmatpush1.bf16.msra.mxu0 0
      %1823 = vmatprep.subr.bf16.mxu0 0
      %1824 = vmatpush1.bf16.msra.mxu0 0
      %1825 = vmatprep.subr.bf16.mxu0 0
      %1826 = vmatpush1.bf16.msra.mxu0 0
      %1827 = vmatprep.subr.bf16.mxu0 0
      %1828 = vmatpush1.bf16.msra.mxu0 0
      %1829 = vmatprep.subr.bf16.mxu0 0
      %1830 = vmatpush1.bf16.msra.mxu0 0
      %1831 = vmatprep.subr.bf16.mxu0 0
      %1832 = vmatpush1.bf16.msra.mxu0 0
      %1833 = vmatprep.subr.bf16.mxu0 0
      %1834 = vmatpush1.bf16.msra.mxu0 0
      %1835 = vmatprep.subr.bf16.mxu0 0
      %1836 = vmatpush1.bf16.msra.mxu0 0
      %1837 = vmatprep.mubr.bf16.mxu0 0
      %1838 = vmatmul.mubr.bf16.gmra.mrb[0].mxu0 %v1803
      %v1839 = vpop.f32.mrb[0].mxu0
      %v1840 = vadd.f32 0.0, %v1839
      %v1841 = vpop.f32.mrb[0].mxu0
      %v1842 = vpop.f32.mrb[0].mxu0
      %v1843 = vadd.f32 0.0, %v1842
      %v1844 = vpop.f32.mrb[0].mxu0
      %1845 = vdwg.mxu0
      %v1847 = vsel %vm1621, %v1713, 0
      %1849 = vmatprep.subr.bf16.mxu0 0
      %1850 = vmatpush1.bf16.msra.mxu0 %v1416
      %1851 = vmatprep.subr.bf16.mxu0 0
      %1852 = vmatpush1.bf16.msra.mxu0 0
      %1853 = vmatprep.subr.bf16.mxu0 0
      %1854 = vmatpush1.bf16.msra.mxu0 0
      %1855 = vmatprep.subr.bf16.mxu0 0
      %1856 = vmatpush1.bf16.msra.mxu0 0
      %1857 = vmatprep.subr.bf16.mxu0 0
      %1858 = vmatpush1.bf16.msra.mxu0 0
      %1859 = vmatprep.subr.bf16.mxu0 0
      %1860 = vmatpush1.bf16.msra.mxu0 0
      %1861 = vmatprep.subr.bf16.mxu0 0
      %1862 = vmatpush1.bf16.msra.mxu0 0
      %1863 = vmatprep.subr.bf16.mxu0 0
      %1864 = vmatpush1.bf16.msra.mxu0 0
      %1865 = vmatprep.subr.bf16.mxu0 0
      %1866 = vmatpush1.bf16.msra.mxu0 0
      %1867 = vmatprep.subr.bf16.mxu0 0
      %1868 = vmatpush1.bf16.msra.mxu0 0
      %1869 = vmatprep.subr.bf16.mxu0 0
      %1870 = vmatpush1.bf16.msra.mxu0 0
      %1871 = vmatprep.subr.bf16.mxu0 0
      %1872 = vmatpush1.bf16.msra.mxu0 0
      %1873 = vmatprep.subr.bf16.mxu0 0
      %1874 = vmatpush1.bf16.msra.mxu0 0
      %1875 = vmatprep.subr.bf16.mxu0 0
      %1876 = vmatpush1.bf16.msra.mxu0 0
      %1877 = vmatprep.subr.bf16.mxu0 0
      %1878 = vmatpush1.bf16.msra.mxu0 0
      %1879 = vmatprep.subr.bf16.mxu0 0
      %1880 = vmatpush1.bf16.msra.mxu0 0
      %1881 = vmatprep.mubr.bf16.mxu0 0
      %1882 = vmatmul.mubr.bf16.gmra.mrb[0].mxu0 %v1847
      %v1883 = vpop.f32.mrb[0].mxu0
      %v1884 = vadd.f32 0.0, %v1883
      %v1885 = vpop.f32.mrb[0].mxu0
      %v1886 = vpop.f32.mrb[0].mxu0
      %v1887 = vadd.f32 0.0, %v1886
      %v1888 = vpop.f32.mrb[0].mxu0
      %1889 = vdwg.mxu0
      %v1890 = vpack.c.bf16 %v1755, %v1752
      %v1891 = vpack.c.bf16 %v1799, %v1796
      %v1892 = vpack.c.bf16 %v1843, %v1840
      %v1893 = vpack.c.bf16 %v1887, %v1884
      %v1894 = vld [vmem:[%s4] sm:$0xf]
      %v1895 = vld [vmem:[%s4 + $0x4] sm:$0xf]
      %v1896 = vld [vmem:[%s4 + $0x8] sm:$0xf]
      %v1897 = vld [vmem:[%s4 + $0xc] sm:$0xf]
      %v1899 = vsel %vm1417, %v1890, 0
      %vm1901 = vcmask 1043456
      %v1903 = vsel %vm1901, %v1894, 0
      %1905 = vmatprep.subr.bf16.mxu0 0
      %1906 = vmatpush1.bf16.msra.mxu0 %v1903
      %1907 = vmatprep.subr.bf16.mxu0 0
      %1908 = vmatpush1.bf16.msra.mxu0 0
      %1909 = vmatprep.subr.bf16.mxu0 0
      %1910 = vmatpush1.bf16.msra.mxu0 0
      %1911 = vmatprep.subr.bf16.mxu0 0
      %1912 = vmatpush1.bf16.msra.mxu0 0
      %1913 = vmatprep.subr.bf16.mxu0 0
      %1914 = vmatpush1.bf16.msra.mxu0 0
      %1915 = vmatprep.subr.bf16.mxu0 0
      %1916 = vmatpush1.bf16.msra.mxu0 0
      %1917 = vmatprep.subr.bf16.mxu0 0
      %1918 = vmatpush1.bf16.msra.mxu0 0
      %1919 = vmatprep.subr.bf16.mxu0 0
      %1920 = vmatpush1.bf16.msra.mxu0 0
      %1921 = vmatprep.subr.bf16.mxu0 0
      %1922 = vmatpush1.bf16.msra.mxu0 0
      %1923 = vmatprep.subr.bf16.mxu0 0
      %1924 = vmatpush1.bf16.msra.mxu0 0
      %1925 = vmatprep.subr.bf16.mxu0 0
      %1926 = vmatpush1.bf16.msra.mxu0 0
      %1927 = vmatprep.subr.bf16.mxu0 0
      %1928 = vmatpush1.bf16.msra.mxu0 0
      %1929 = vmatprep.subr.bf16.mxu0 0
      %1930 = vmatpush1.bf16.msra.mxu0 0
      %1931 = vmatprep.subr.bf16.mxu0 0
      %1932 = vmatpush1.bf16.msra.mxu0 0
      %1933 = vmatprep.subr.bf16.mxu0 0
      %1934 = vmatpush1.bf16.msra.mxu0 0
      %1935 = vmatprep.subr.bf16.mxu0 0
      %1936 = vmatpush1.bf16.msra.mxu0 0
      %1937 = vmatprep.mubr.bf16.mxu0 0
      %1938 = vmatmul.mubr.bf16.gmra.mrb[0].mxu0 %v1899
      %v1939 = vpop.f32.mrb[0].mxu0
      %v1940 = vadd.f32 0.0, %v1939
      %v1941 = vpop.f32.mrb[0].mxu0
      %v1942 = vpop.f32.mrb[0].mxu0
      %v1943 = vadd.f32 0.0, %v1942
      %v1944 = vpop.f32.mrb[0].mxu0
      %1945 = vdwg.mxu0
      %v1947 = vsel %vm1417, %v1891, 0
      %v1950 = vsel %vm1901, %v1895, 0
      %1952 = vmatprep.subr.bf16.mxu0 0
      %1953 = vmatpush1.bf16.msra.mxu0 %v1950
      %1954 = vmatprep.subr.bf16.mxu0 0
      %1955 = vmatpush1.bf16.msra.mxu0 0
      %1956 = vmatprep.subr.bf16.mxu0 0
      %1957 = vmatpush1.bf16.msra.mxu0 0
      %1958 = vmatprep.subr.bf16.mxu0 0
      %1959 = vmatpush1.bf16.msra.mxu0 0
      %1960 = vmatprep.subr.bf16.mxu0 0
      %1961 = vmatpush1.bf16.msra.mxu0 0
      %1962 = vmatprep.subr.bf16.mxu0 0
      %1963 = vmatpush1.bf16.msra.mxu0 0
      %1964 = vmatprep.subr.bf16.mxu0 0
      %1965 = vmatpush1.bf16.msra.mxu0 0
      %1966 = vmatprep.subr.bf16.mxu0 0
      %1967 = vmatpush1.bf16.msra.mxu0 0
      %1968 = vmatprep.subr.bf16.mxu0 0
      %1969 = vmatpush1.bf16.msra.mxu0 0
      %1970 = vmatprep.subr.bf16.mxu0 0
      %1971 = vmatpush1.bf16.msra.mxu0 0
      %1972 = vmatprep.subr.bf16.mxu0 0
      %1973 = vmatpush1.bf16.msra.mxu0 0
      %1974 = vmatprep.subr.bf16.mxu0 0
      %1975 = vmatpush1.bf16.msra.mxu0 0
      %1976 = vmatprep.subr.bf16.mxu0 0
      %1977 = vmatpush1.bf16.msra.mxu0 0
      %1978 = vmatprep.subr.bf16.mxu0 0
      %1979 = vmatpush1.bf16.msra.mxu0 0
      %1980 = vmatprep.subr.bf16.mxu0 0
      %1981 = vmatpush1.bf16.msra.mxu0 0
      %1982 = vmatprep.subr.bf16.mxu0 0
      %1983 = vmatpush1.bf16.msra.mxu0 0
      %1984 = vmatprep.mubr.bf16.mxu0 0
      %1985 = vmatmul.mubr.bf16.gmra.mrb[0].mxu0 %v1947
      %v1986 = vpop.f32.mrb[0].mxu0
      %v1987 = vadd.f32 0.0, %v1986
      %v1988 = vpop.f32.mrb[0].mxu0
      %v1989 = vpop.f32.mrb[0].mxu0
      %v1990 = vadd.f32 0.0, %v1989
      %v1991 = vpop.f32.mrb[0].mxu0
      %1992 = vdwg.mxu0
      %v1994 = vsel %vm1417, %v1892, 0
      %v1997 = vsel %vm1901, %v1896, 0
      %1999 = vmatprep.subr.bf16.mxu0 0
      %2000 = vmatpush1.bf16.msra.mxu0 %v1997
      %2001 = vmatprep.subr.bf16.mxu0 0
      %2002 = vmatpush1.bf16.msra.mxu0 0
      %2003 = vmatprep.subr.bf16.mxu0 0
      %2004 = vmatpush1.bf16.msra.mxu0 0
      %2005 = vmatprep.subr.bf16.mxu0 0
      %2006 = vmatpush1.bf16.msra.mxu0 0
      %2007 = vmatprep.subr.bf16.mxu0 0
      %2008 = vmatpush1.bf16.msra.mxu0 0
      %2009 = vmatprep.subr.bf16.mxu0 0
      %2010 = vmatpush1.bf16.msra.mxu0 0
      %2011 = vmatprep.subr.bf16.mxu0 0
      %2012 = vmatpush1.bf16.msra.mxu0 0
      %2013 = vmatprep.subr.bf16.mxu0 0
      %2014 = vmatpush1.bf16.msra.mxu0 0
      %2015 = vmatprep.subr.bf16.mxu0 0
      %2016 = vmatpush1.bf16.msra.mxu0 0
      %2017 = vmatprep.subr.bf16.mxu0 0
      %2018 = vmatpush1.bf16.msra.mxu0 0
      %2019 = vmatprep.subr.bf16.mxu0 0
      %2020 = vmatpush1.bf16.msra.mxu0 0
      %2021 = vmatprep.subr.bf16.mxu0 0
      %2022 = vmatpush1.bf16.msra.mxu0 0
      %2023 = vmatprep.subr.bf16.mxu0 0
      %2024 = vmatpush1.bf16.msra.mxu0 0
      %2025 = vmatprep.subr.bf16.mxu0 0
      %2026 = vmatpush1.bf16.msra.mxu0 0
      %2027 = vmatprep.subr.bf16.mxu0 0
      %2028 = vmatpush1.bf16.msra.mxu0 0
      %2029 = vmatprep.subr.bf16.mxu0 0
      %2030 = vmatpush1.bf16.msra.mxu0 0
      %2031 = vmatprep.mubr.bf16.mxu0 0
      %2032 = vmatmul.mubr.bf16.gmra.mrb[0].mxu0 %v1994
      %v2033 = vpop.f32.mrb[0].mxu0
      %v2034 = vadd.f32 0.0, %v2033
      %v2035 = vpop.f32.mrb[0].mxu0
      %v2036 = vpop.f32.mrb[0].mxu0
      %v2037 = vadd.f32 0.0, %v2036
      %v2038 = vpop.f32.mrb[0].mxu0
      %2039 = vdwg.mxu0
      %v2041 = vsel %vm1417, %v1893, 0
      %v2044 = vsel %vm1901, %v1897, 0
      %2046 = vmatprep.subr.bf16.mxu0 0
      %2047 = vmatpush1.bf16.msra.mxu0 %v2044
      %2048 = vmatprep.subr.bf16.mxu0 0
      %2049 = vmatpush1.bf16.msra.mxu0 0
      %2050 = vmatprep.subr.bf16.mxu0 0
      %2051 = vmatpush1.bf16.msra.mxu0 0
      %2052 = vmatprep.subr.bf16.mxu0 0
      %2053 = vmatpush1.bf16.msra.mxu0 0
      %2054 = vmatprep.subr.bf16.mxu0 0
      %2055 = vmatpush1.bf16.msra.mxu0 0
      %2056 = vmatprep.subr.bf16.mxu0 0
      %2057 = vmatpush1.bf16.msra.mxu0 0
      %2058 = vmatprep.subr.bf16.mxu0 0
      %2059 = vmatpush1.bf16.msra.mxu0 0
      %2060 = vmatprep.subr.bf16.mxu0 0
      %2061 = vmatpush1.bf16.msra.mxu0 0
      %2062 = vmatprep.subr.bf16.mxu0 0
      %2063 = vmatpush1.bf16.msra.mxu0 0
      %2064 = vmatprep.subr.bf16.mxu0 0
      %2065 = vmatpush1.bf16.msra.mxu0 0
      %2066 = vmatprep.subr.bf16.mxu0 0
      %2067 = vmatpush1.bf16.msra.mxu0 0
      %2068 = vmatprep.subr.bf16.mxu0 0
      %2069 = vmatpush1.bf16.msra.mxu0 0
      %2070 = vmatprep.subr.bf16.mxu0 0
      %2071 = vmatpush1.bf16.msra.mxu0 0
      %2072 = vmatprep.subr.bf16.mxu0 0
      %2073 = vmatpush1.bf16.msra.mxu0 0
      %2074 = vmatprep.subr.bf16.mxu0 0
      %2075 = vmatpush1.bf16.msra.mxu0 0
      %2076 = vmatprep.subr.bf16.mxu0 0
      %2077 = vmatpush1.bf16.msra.mxu0 0
      %2078 = vmatprep.mubr.bf16.mxu0 0
      %2079 = vmatmul.mubr.bf16.gmra.mrb[0].mxu0 %v2041
      %v2080 = vpop.f32.mrb[0].mxu0
      %v2081 = vadd.f32 0.0, %v2080
      %v2082 = vpop.f32.mrb[0].mxu0
      %v2083 = vpop.f32.mrb[0].mxu0
      %v2084 = vadd.f32 0.0, %v2083
      %v2085 = vpop.f32.mrb[0].mxu0
      %2086 = vdwg.mxu0
      %v2087 = vsel %vm476, %v1940, 0.0
      %v2088 = vsel %vm476, %v1987, 0.0
      %v2089 = vadd.f32 %v2087, %v2088
      %v2090 = vsel %vm476, %v2034, 0.0
      %v2091 = vadd.f32 %v2089, %v2090
      %v2092 = vsel %vm476, %v2081, 0.0
      %v2093 = vadd.f32 %v2091, %v2092
      %v2094 = vsel %vm476, %v1943, 0.0
      %v2095 = vsel %vm476, %v1990, 0.0
      %v2096 = vadd.f32 %v2094, %v2095
      %v2097 = vsel %vm476, %v2037, 0.0
      %v2098 = vadd.f32 %v2096, %v2097
      %v2099 = vsel %vm476, %v2084, 0.0
      %v2100 = vadd.f32 %v2098, %v2099
      %v2101 = vld [vmem:[%s5] sm:$0x1]
      %v2103 = vlaneseq
      %v2104 = vshrl.u32 %v2103, 7
      %v2105 = vsub.s32 0, %v2104
      %v2106 = vrot.slane %v2101, %v2105
      %v2108 = vadd.f32 %v2093, %v2106
      %v2109 = vadd.f32 %v2100, %v2106
      %v2110 = vadd.f32 %v446, %v2108
      %v2111 = vadd.f32 %v447, %v2109
      %v2112 = vsel %vm476, %v2110, 0.0
      %2113 = vadd.xlane.f32.xlu0 %v2112
      %v2114 = vpop.xlane.xlu0 %2113
      %v2115 = vsel %vm476, %v2111, 0.0
      %2116 = vadd.xlane.f32.xlu0 %v2115
      %v2117 = vpop.xlane.xlu0 %2116
      %v2118 = vrcp.pop 32.0
      %v2119 = vmul.f32 %v2114, %v2118
      %v2120 = vmul.f32 %v2117, %v2118
      %v2121 = vsub.f32 %v2110, %v2119
      %v2122 = vsub.f32 %v2111, %v2120
      %v2123 = vmul.f32 %v2121, %v2121
      %v2124 = vmul.f32 %v2122, %v2122
      %v2125 = vsel %vm476, %v2123, 0.0
      %2126 = vadd.xlane.f32.xlu0 %v2125
      %v2127 = vpop.xlane.xlu0 %2126
      %v2128 = vsel %vm476, %v2124, 0.0
      %2129 = vadd.xlane.f32.xlu0 %v2128
      %v2130 = vpop.xlane.xlu0 %2129
      %v2131 = vmul.f32 %v2127, %v2118
      %v2132 = vmul.f32 %v2130, %v2118
      %v2133 = vadd.f32 %v2131, 1e-05
      %v2134 = vadd.f32 %v2132, 1e-05
      %v2135 = vrsqrt.pop %v2133
      %v2136 = vrsqrt.pop %v2134
      %v2137 = vmul.f32 %v2121, %v2135
      %v2138 = vmul.f32 %v2122, %v2136
      %v2139 = vld [vmem:[%s6] sm:$0x1]
      %v2141 = vlaneseq
      %v2142 = vshrl.u32 %v2141, 7
      %v2143 = vsub.s32 0, %v2142
      %v2144 = vrot.slane %v2139, %v2143
      %v2146 = vmul.f32 %v2137, %v2144
      %v2147 = vmul.f32 %v2138, %v2144
      %v2148 = vld [vmem:[%s7] sm:$0x1]
      %v2150 = vlaneseq
      %v2151 = vshrl.u32 %v2150, 7
      %v2152 = vsub.s32 0, %v2151
      %v2153 = vrot.slane %v2148, %v2152
      %v2155 = vadd.f32 %v2146, %v2153
      %v2156 = vadd.f32 %v2147, %v2153
      %v2157 = vpack.c.bf16 %v2156, %v2155
      %v2158 = vld [vmem:[%s8] sm:$0xf]
      %v2159 = vld [vmem:[%s8 + $0x4] sm:$0xf]
      %v2160 = vld [vmem:[%s8 + $0x8] sm:$0xf]
      %v2161 = vld [vmem:[%s8 + $0xc] sm:$0xf]
      %v2162 = vld [vmem:[%s9] sm:$0x1]
      %v2164 = vlaneseq
      %v2165 = vshrl.u32 %v2164, 7
      %v2166 = vsub.s32 0, %v2165
      %v2167 = vrot.slane %v2162, %v2166
      %v2173 = vunpack.c.l.b16 %v2158
      %v2174 = vunpack.c.l.b16 %v2159
      %v2175 = vunpack.c.l.b16 %v2160
      %v2176 = vunpack.c.l.b16 %v2161
      %v2177 = vpack.c.b16 %v2174, %v2173
      %v2178 = vpack.c.b16 %v2176, %v2175
      %v2182 = vsel %vm476, %v2157, 0
      %2184 = vmatprep.subr.bf16.mxu0 0
      %2185 = vmatpush1.bf16.msra.mxu0 %v2177
      %2186 = vmatprep.subr.bf16.mxu0 0
      %2187 = vmatpush1.bf16.msra.mxu0 %v2178
      %2188 = vmatprep.subr.bf16.mxu0 0
      %2189 = vmatpush1.bf16.msra.mxu0 0
      %2190 = vmatprep.subr.bf16.mxu0 0
      %2191 = vmatpush1.bf16.msra.mxu0 0
      %2192 = vmatprep.subr.bf16.mxu0 0
      %2193 = vmatpush1.bf16.msra.mxu0 0
      %2194 = vmatprep.subr.bf16.mxu0 0
      %2195 = vmatpush1.bf16.msra.mxu0 0
      %2196 = vmatprep.subr.bf16.mxu0 0
      %2197 = vmatpush1.bf16.msra.mxu0 0
      %2198 = vmatprep.subr.bf16.mxu0 0
      %2199 = vmatpush1.bf16.msra.mxu0 0
      %2200 = vmatprep.subr.bf16.mxu0 0
      %2201 = vmatpush1.bf16.msra.mxu0 0
      %2202 = vmatprep.subr.bf16.mxu0 0
      %2203 = vmatpush1.bf16.msra.mxu0 0
      %2204 = vmatprep.subr.bf16.mxu0 0
      %2205 = vmatpush1.bf16.msra.mxu0 0
      %2206 = vmatprep.subr.bf16.mxu0 0
      %2207 = vmatpush1.bf16.msra.mxu0 0
      %2208 = vmatprep.subr.bf16.mxu0 0
      %2209 = vmatpush1.bf16.msra.mxu0 0
      %2210 = vmatprep.subr.bf16.mxu0 0
      %2211 = vmatpush1.bf16.msra.mxu0 0
      %2212 = vmatprep.subr.bf16.mxu0 0
      %2213 = vmatpush1.bf16.msra.mxu0 0
      %2214 = vmatprep.subr.bf16.mxu0 0
      %2215 = vmatpush1.bf16.msra.mxu0 0
      %2216 = vmatprep.mubr.bf16.mxu0 0
      %2217 = vmatmul.mubr.bf16.gmra.mrb[0].mxu0 %v2182
      %v2218 = vpop.f32.mrb[0].mxu0
      %v2219 = vadd.f32 %v2167, %v2218
      %v2220 = vpop.f32.mrb[0].mxu0
      %v2221 = vpop.f32.mrb[0].mxu0
      %v2222 = vadd.f32 %v2167, %v2221
      %v2223 = vpop.f32.mrb[0].mxu0
      %2224 = vdwg.mxu0
      %v2225 = vmax.f32 %v2219, 0.0
      %v2226 = vmax.f32 %v2222, 0.0
      %v2227 = vpack.c.bf16 %v2226, %v2225
      %v2228 = vld [vmem:[%s10] sm:$0xf]
      %v2229 = vld [vmem:[%s10 + $0x4] sm:$0xf]
      %v2230 = vld [vmem:[%s10 + $0x8] sm:$0xf]
      %v2231 = vld [vmem:[%s10 + $0xc] sm:$0xf]
      %v2232 = vld [vmem:[%s10 + $0x10] sm:$0xf]
      %v2233 = vld [vmem:[%s10 + $0x14] sm:$0xf]
      %v2234 = vld [vmem:[%s10 + $0x18] sm:$0xf]
      %v2235 = vld [vmem:[%s10 + $0x1c] sm:$0xf]
      %v2236 = vld [vmem:[%s11] sm:$0x1]
      %v2238 = vlaneseq
      %v2239 = vshrl.u32 %v2238, 7
      %v2240 = vsub.s32 0, %v2239
      %v2241 = vrot.slane %v2236, %v2240
      %v2251 = vunpack.c.l.b16 %v2228
      %v2252 = vunpack.c.l.b16 %v2229
      %v2253 = vunpack.c.l.b16 %v2230
      %v2254 = vunpack.c.l.b16 %v2231
      %v2255 = vunpack.c.l.b16 %v2232
      %v2256 = vunpack.c.l.b16 %v2233
      %v2257 = vunpack.c.l.b16 %v2234
      %v2258 = vunpack.c.l.b16 %v2235
      %v2259 = vpack.c.b16 %v2252, %v2251
      %v2260 = vpack.c.b16 %v2254, %v2253
      %v2261 = vpack.c.b16 %v2256, %v2255
      %v2262 = vpack.c.b16 %v2258, %v2257
      %vm2267 = vcmask 523264
      %v2269 = vsel %vm2267, %v2227, 0
      %2271 = vmatprep.subr.bf16.mxu0 0
      %2272 = vmatpush1.bf16.msra.mxu0 %v2259
      %2273 = vmatprep.subr.bf16.mxu0 0
      %2274 = vmatpush1.bf16.msra.mxu0 %v2260
      %2275 = vmatprep.subr.bf16.mxu0 0
      %2276 = vmatpush1.bf16.msra.mxu0 %v2261
      %2277 = vmatprep.subr.bf16.mxu0 0
      %2278 = vmatpush1.bf16.msra.mxu0 %v2262
      %2279 = vmatprep.subr.bf16.mxu0 0
      %2280 = vmatpush1.bf16.msra.mxu0 0
      %2281 = vmatprep.subr.bf16.mxu0 0
      %2282 = vmatpush1.bf16.msra.mxu0 0
      %2283 = vmatprep.subr.bf16.mxu0 0
      %2284 = vmatpush1.bf16.msra.mxu0 0
      %2285 = vmatprep.subr.bf16.mxu0 0
      %2286 = vmatpush1.bf16.msra.mxu0 0
      %2287 = vmatprep.subr.bf16.mxu0 0
      %2288 = vmatpush1.bf16.msra.mxu0 0
      %2289 = vmatprep.subr.bf16.mxu0 0
      %2290 = vmatpush1.bf16.msra.mxu0 0
      %2291 = vmatprep.subr.bf16.mxu0 0
      %2292 = vmatpush1.bf16.msra.mxu0 0
      %2293 = vmatprep.subr.bf16.mxu0 0
      %2294 = vmatpush1.bf16.msra.mxu0 0
      %2295 = vmatprep.subr.bf16.mxu0 0
      %2296 = vmatpush1.bf16.msra.mxu0 0
      %2297 = vmatprep.subr.bf16.mxu0 0
      %2298 = vmatpush1.bf16.msra.mxu0 0
      %2299 = vmatprep.subr.bf16.mxu0 0
      %2300 = vmatpush1.bf16.msra.mxu0 0
      %2301 = vmatprep.subr.bf16.mxu0 0
      %2302 = vmatpush1.bf16.msra.mxu0 0
      %2303 = vmatprep.mubr.bf16.mxu0 0
      %2304 = vmatmul.mubr.bf16.gmra.mrb[0].mxu0 %v2269
      %v2305 = vpop.f32.mrb[0].mxu0
      %v2306 = vadd.f32 %v2241, %v2305
      %v2307 = vpop.f32.mrb[0].mxu0
      %v2308 = vpop.f32.mrb[0].mxu0
      %v2309 = vadd.f32 %v2241, %v2308
      %v2310 = vpop.f32.mrb[0].mxu0
      %2311 = vdwg.mxu0
      %v2312 = vadd.f32 %v2155, %v2306
      %v2313 = vadd.f32 %v2156, %v2309
      %v2314 = vsel %vm476, %v2312, 0.0
      %2315 = vadd.xlane.f32.xlu0 %v2314
      %v2316 = vpop.xlane.xlu0 %2315
      %v2317 = vsel %vm476, %v2313, 0.0
      %2318 = vadd.xlane.f32.xlu0 %v2317
      %v2319 = vpop.xlane.xlu0 %2318
      %v2320 = vmul.f32 %v2316, %v2118
      %v2321 = vmul.f32 %v2319, %v2118
      %v2322 = vsub.f32 %v2312, %v2320
      %v2323 = vsub.f32 %v2313, %v2321
      %v2324 = vmul.f32 %v2322, %v2322
      %v2325 = vmul.f32 %v2323, %v2323
      %v2326 = vsel %vm476, %v2324, 0.0
      %2327 = vadd.xlane.f32.xlu0 %v2326
      %v2328 = vpop.xlane.xlu0 %2327
      %v2329 = vsel %vm476, %v2325, 0.0
      %2330 = vadd.xlane.f32.xlu0 %v2329
      %v2331 = vpop.xlane.xlu0 %2330
      %v2332 = vmul.f32 %v2328, %v2118
      %v2333 = vmul.f32 %v2331, %v2118
      %v2334 = vadd.f32 %v2332, 1e-05
      %v2335 = vadd.f32 %v2333, 1e-05
      %v2336 = vrsqrt.pop %v2334
      %v2337 = vrsqrt.pop %v2335
      %v2338 = vmul.f32 %v2322, %v2336
      %v2339 = vmul.f32 %v2323, %v2337
      %v2340 = vld [vmem:[%s12] sm:$0x1]
      %v2342 = vlaneseq
      %v2343 = vshrl.u32 %v2342, 7
      %v2344 = vsub.s32 0, %v2343
      %v2345 = vrot.slane %v2340, %v2344
      %v2347 = vmul.f32 %v2338, %v2345
      %v2348 = vmul.f32 %v2339, %v2345
      %v2349 = vld [vmem:[%s13] sm:$0x1]
      %v2351 = vlaneseq
      %v2352 = vshrl.u32 %v2351, 7
      %v2353 = vsub.s32 0, %v2352
      %v2354 = vrot.slane %v2349, %v2353
      %v2356 = vadd.f32 %v2347, %v2354
      %v2357 = vadd.f32 %v2348, %v2354
      %v2358 = vpack.c.bf16 %v2357, %v2356
      %v2360 = vunpack.c.l.b16 %v2358
      %v2361 = vunpack.c.h.b16 %v2358
      %v2362 = vpack.c.b16 %v2360, %v2360
      %v2363 = vpack.c.b16 %v2361, %v2361
      %vm2366 = vcmask 257024
      %2367 = vst.msk [vmem:[%s442] sm:$0xf] %vm2366, %v2362
      %2368 = vst.msk [vmem:[%s442 + $0x4] sm:$0xf] %vm2366, %v2363
      %p2369 = scmp.lt.s32.totalorder %s26, 1
      %s2370 = scalar_select %p2369, %s26, 1
      %s2371 = smul.addr %s2370, 2
      %s2372 = smul.addr %s2371, 4
      %s2373 = scalar_lea.vmem %s14, %s2372
      // Predicated region
      $region73: #{mdm_forward.2} parent=71 // pred_check
        %p2374 = pneg %p322
      $region74: #{mdm_forward.2} parent=71 // pred_check_branch
        %2376 = sbr.rel (%p2374) target = $region76
      $region75: #{mdm_forward.2} parent=71 // pred_region
        _
      $region76: #{mdm_forward.2} parent=71 // pred_fallthru
        _
    $region72: #{mdm_forward.2} parent=5 // pred_fallthru
      _
    %p2377 = scmp.le.s32.totalorder 2, %s21
    // Predicated region
    $region77: #{mdm_forward.2} parent=5 // pred_check
      %p2378 = pneg %p2377
    $region78: #{mdm_forward.2} parent=5 // pred_check_branch
      %2380 = sbr.rel (%p2378) target = $region80
    $region79: #{mdm_forward.2} parent=5 // pred_region
      %s2381 = ssub.s32 %s21, 2
      // Predicated region
      $region81: #{mdm_forward.2} parent=79 // pred_check
        %p2382 = pneg %p328
      $region82: #{mdm_forward.2} parent=79 // pred_check_branch
        %2384 = sbr.rel (%p2382) target = $region84
      $region83: #{mdm_forward.2} parent=79 // pred_region
        %p2385 = scmp.lt.s32.totalorder %s27, 1
        %s2386 = scalar_select %p2385, %s27, 1
        %s2387 = smul.addr %s2386, 2
        %s2388 = smul.addr %s2387, 4
        %s2389 = scalar_lea.vmem %s14, %s2388
      $region84: #{mdm_forward.2} parent=79 // pred_fallthru
        _
    $region80: #{mdm_forward.2} parent=5 // pred_fallthru
      _
  $region6: #{mdm_forward.2} parent=0 // loop_footer
    %s25 = sadd.s32 1, %s21
  $region7: #{mdm_forward.2} parent=0 // loop_footer_branch
    %20 = sbr.rel target = $region3
  $region8: #{mdm_forward.2} parent=0 // loop_exit
    _

</llo_original>
